<compile_context>
chip_gen: v7x
topology: tpu7x:2x2x1
jax: 0.10.0
libtpu: 0.0.40
codegen_flags: <defaults>
</compile_context>

<pallas_src>
import jax
import jax.numpy as jnp
from jax.experimental import pallas as pl
from jax.experimental.pallas import tpu as pltpu

T, B, F, H = 8, 2, 15, 128          # seq, batch, input features, hidden
D1, D2, D3 = 64, 32, 2              # MLP layer widths
LANES = 128

# Row offsets of the packed MLP-head parameter slab (all multiples of 8).
_W1_R, _B1_R = 0, 128
_W2_R, _B2_R = 136, 264
_W3_R, _B3_R = 272, 400
_HEAD_ROWS = 408


def _sigmoid_tanh(z):
    # sigmoid(z) == 0.5*tanh(0.5*z) + 0.5 : one EUP op + one FMA, no divide.
    return 0.5 * jnp.tanh(0.5 * z) + 0.5


# ------------------------- single fused kernel ------------------------------
def net_kernel(x_ref, wih_ref, whh_ref, head_ref, out_ref, xproj_ref, hs_ref):
    # ---------------- LSTM ----------------
    # Hoisted input projection for all steps; bias folded in via the ones col.
    xproj_ref[...] = jnp.dot(x_ref[...], wih_ref[...],
                             preferred_element_type=jnp.float32)       # (T*B, 4H)

    w_hh = whh_ref[...]                          # (H, 4H) -- loaded once, reused
    h = jnp.zeros((B, H), jnp.float32)
    c = jnp.zeros((B, H), jnp.float32)
    for t in range(T):                           # static trip count -> unrolled
        gates = xproj_ref[t * B:(t + 1) * B, :] + jnp.dot(
            h, w_hh, preferred_element_type=jnp.float32)               # (B, 4H)
        # gate columns pre-permuted to (i, f, o, g): one tanh slab = 3 sigmoids
        sg = _sigmoid_tanh(gates[:, :3 * H])
        i_g = sg[:, 0 * H:1 * H]
        f_g = sg[:, 1 * H:2 * H]
        o_g = sg[:, 2 * H:3 * H]
        g_g = jnp.tanh(gates[:, 3 * H:])
        c = f_g * c + i_g * g_g
        h = o_g * jnp.tanh(c)
        hs_ref[t * B:(t + 1) * B, :] = h         # t-major rows, off the h->c path

    # ------------- MLP head, batched over both batch elements ---------------
    hs = hs_ref[...]                                                   # (T*B, H)
    w1 = head_ref[_W1_R:_W1_R + H, :]        # (128,128), cols >= 64 zero
    b1 = head_ref[_B1_R:_B1_R + 1, :]
    w2 = head_ref[_W2_R:_W2_R + LANES, :]    # (128,128), real block [0:64, 0:32]
    b2 = head_ref[_B2_R:_B2_R + 1, :]
    w3 = head_ref[_W3_R:_W3_R + LANES, :]    # (128,128), real block [0:32, 0:2]
    b3 = head_ref[_B3_R:_B3_R + 1, :]

    def softmax_time(z):
        # Legacy nn.Softmax() on a 3-D (T, B, D) tensor normalizes over dim 0
        # (time).  Rows of z are t-major, so reduce over the T two-row slices.
        m = z[0:B, :]
        for t in range(1, T):
            m = jnp.maximum(m, z[t * B:(t + 1) * B, :])
        e = jnp.exp(z - jnp.concatenate([m] * T, axis=0))
        s = e[0:B, :]
        for t in range(1, T):
            s = s + e[t * B:(t + 1) * B, :]
        r = pl.reciprocal(s, approx=True)        # EUP slot, off the VALU path
        r = r * (2.0 - s * r)                    # one Newton step -> ~f32 exact
        return e * jnp.concatenate([r] * T, axis=0)

    a1 = softmax_time(jnp.dot(hs, w1, preferred_element_type=jnp.float32) + b1)
    a2 = softmax_time(jnp.dot(a1, w2, preferred_element_type=jnp.float32) + b2)
    z3 = jnp.dot(a2, w3, preferred_element_type=jnp.float32) + b3      # (T*B, 128)
    out_ref[...] = _sigmoid_tanh(z3[:, :D3])                           # (T*B, D3)


def net_forward(x, kp):
    """x: (T, B, F) -> (T, B, D3)."""
    x2 = x.reshape(T * B, F)
    # Append a ones column so the fused LSTM bias rides inside W_ih (K: 15->16).
    x_aug = jnp.concatenate([x2, jnp.ones((T * B, 1), x2.dtype)], axis=1)

    vmem = pl.BlockSpec(memory_space=pltpu.MemorySpace.VMEM)
    out = pl.pallas_call(
        net_kernel,
        out_shape=jax.ShapeDtypeStruct((T * B, D3), jnp.float32),
        in_specs=[vmem] * 4,
        out_specs=vmem,
        scratch_shapes=[pltpu.VMEM((T * B, 4 * H), jnp.float32),   # x_proj
                        pltpu.VMEM((T * B, H), jnp.float32)],      # h per step
    )(x_aug, kp["w_ih_aug"], kp["w_hh_t"], kp["head"])
    # Rows are already t-major: this reshape is a free bitcast (no transpose).
    return out.reshape(T, B, D3)


net_forward_jit = jax.jit(net_forward)


# ------------------------------ parameters ----------------------------------
def init_params(key):
    """PyTorch-layout parameters (LSTM gate order i, f, g, o)."""
    ks = jax.random.split(key, 10)

    def unif(k, shape, fan):
        bound = 1.0 / jnp.sqrt(fan)
        return jax.random.uniform(k, shape, jnp.float32, -bound, bound)

    return dict(
        w_ih=unif(ks[0], (4 * H, F), H),
        w_hh=unif(ks[1], (4 * H, H), H),
        b_ih=unif(ks[2], (4 * H,), H),
        b_hh=unif(ks[3], (4 * H,), H),
        w1=unif(ks[4], (D1, H), H), b1=unif(ks[5], (D1,), H),
        w2=unif(ks[6], (D2, D1), D1), b2=unif(ks[7], (D2,), D1),
        w3=unif(ks[8], (D3, D2), D2), b3=unif(ks[9], (D3,), D2),
    )


def _pad_block(a, rows):
    """Zero-pad a 2-D block to (rows, 128)."""
    r, c = a.shape
    blk = jnp.zeros((rows, LANES), jnp.float32)
    return blk.at[:r, :c].set(a)


def prep_kernel_params(p):
    """Pure layout transforms (no numerics change):
       * transpose for x @ W, fuse the two LSTM biases, fold them into W_ih,
       * permute LSTM gate order (i,f,g,o) -> (i,f,o,g),
       * pack the MLP head into one 128-lane slab with 8-row-aligned sections.
       Zero padding is inert: padded weight rows/cols are zero and the dim-0
       softmax normalizes each column independently."""
    perm = jnp.concatenate([jnp.arange(0, H), jnp.arange(H, 2 * H),
                            jnp.arange(3 * H, 4 * H), jnp.arange(2 * H, 3 * H)])
    w_ih_t = p["w_ih"][perm].T                                   # (F, 4H)
    b_lstm = (p["b_ih"] + p["b_hh"])[perm].reshape(1, 4 * H)

    head = jnp.concatenate([
        _pad_block(p["w1"].T, H),                 # rows   0:128
        _pad_block(p["b1"].reshape(1, D1), 8),    # rows 128:136
        _pad_block(p["w2"].T, LANES),             # rows 136:264
        _pad_block(p["b2"].reshape(1, D2), 8),    # rows 264:272
        _pad_block(p["w3"].T, LANES),             # rows 272:400
        _pad_block(p["b3"].reshape(1, D3), 8),    # rows 400:408
    ], axis=0)
    assert head.shape == (_HEAD_ROWS, LANES)

    return dict(
        w_ih_aug=jnp.concatenate([w_ih_t, b_lstm], axis=0),      # (F+1, 4H)
        w_hh_t=p["w_hh"][perm].T,                                 # (H, 4H)
        head=head,
    )


# ------------------------- pure-JAX reference -------------------------------
def net_reference(x, p):
    w_ih_t = p["w_ih"].T
    w_hh_t = p["w_hh"].T
    bias = (p["b_ih"] + p["b_hh"]).reshape(1, 4 * H)

    def step(carry, x_t):
        h, c = carry
        gates = x_t @ w_ih_t + h @ w_hh_t + bias                 # PyTorch order i,f,g,o
        i = 1.0 / (1.0 + jnp.exp(-gates[:, 0 * H:1 * H]))
        f = 1.0 / (1.0 + jnp.exp(-gates[:, 1 * H:2 * H]))
        g = jnp.tanh(gates[:, 2 * H:3 * H])
        o = 1.0 / (1.0 + jnp.exp(-gates[:, 3 * H:4 * H]))
        c = f * c + i * g
        h = o * jnp.tanh(c)
        return (h, c), h

    h0 = jnp.zeros((B, H), jnp.float32)
    _, hs = jax.lax.scan(step, (h0, h0), x)                      # (T, B, H)

    def softmax0(z):                                             # legacy dim=0
        m = jnp.max(z, axis=0, keepdims=True)
        e = jnp.exp(z - m)
        return e / jnp.sum(e, axis=0, keepdims=True)

    a1 = softmax0(hs @ p["w1"].T + p["b1"])
    a2 = softmax0(a1 @ p["w2"].T + p["b2"])
    return 1.0 / (1.0 + jnp.exp(-(a2 @ p["w3"].T + p["b3"])))


if __name__ == "__main__":
    key = jax.random.PRNGKey(0)
    kx, kp = jax.random.split(key)
    x = jax.random.normal(kx, (T, B, F), jnp.float32)            # (seq, batch, 15)
    params = init_params(kp)
    kernel_params = prep_kernel_params(params)

    out = jax.block_until_ready(net_forward_jit(x, kernel_params))
    ref = net_reference(x, params)

    assert out.shape == (T, B, D3)
    # tanh-form sigmoid + Newton-refined approx reciprocal are not bit-identical
    # to the exp/divide reference, so check at 1e-3 (outputs live in (0, 1)).
    assert jnp.allclose(out, ref, atol=1e-3, rtol=1e-3), "mismatch vs reference"
    print("KERNEL_OK")
</pallas_src>

<mosaic_0001>
module attributes {stable_mosaic.version = 11 : i64} {
  func.func @net_kernel(%arg0: memref<16x16xf32, #tpu.memory_space<vmem>>, %arg1: memref<16x512xf32, #tpu.memory_space<vmem>>, %arg2: memref<128x512xf32, #tpu.memory_space<vmem>>, %arg3: memref<408x128xf32, #tpu.memory_space<vmem>>, %arg4: memref<16x2xf32, #tpu.memory_space<vmem>>, %arg5: memref<16x512xf32, #tpu.memory_space<vmem>>, %arg6: memref<16x128xf32, #tpu.memory_space<vmem>>) attributes {dimension_semantics = [], scalar_prefetch = 0 : i64, scratch_operands = 2 : i64, tpu.core_type = #tpu.core_type<tc>} {
    %c0 = arith.constant 0 : index
    %c0_0 = arith.constant 0 : index
    %0 = vector.load %arg0[%c0, %c0_0] : memref<16x16xf32, #tpu.memory_space<vmem>>, vector<16x16xf32>
    %c0_1 = arith.constant 0 : index
    %c0_2 = arith.constant 0 : index
    %1 = vector.load %arg1[%c0_1, %c0_2] : memref<16x512xf32, #tpu.memory_space<vmem>>, vector<16x512xf32>
    %cst = arith.constant dense<0.000000e+00> : vector<16x512xf32>
    %2 = tpu.matmul %0, %1, %cst {dimension_numbers = #tpu.dot_dimension_numbers<[1], [0], [0], [1], [0, 0, 1, 1], [], []>} : vector<16x16xf32>, vector<16x512xf32>, vector<16x512xf32> -> vector<16x512xf32>
    %c0_3 = arith.constant 0 : index
    %c0_4 = arith.constant 0 : index
    %3 = vector.load %arg5[%c0_3, %c0_4] : memref<16x512xf32, #tpu.memory_space<vmem>>, vector<16x512xf32>
    tpu.vector_store %arg5[%c0_3, %c0_4], %2 {strides = array<i32>} : memref<16x512xf32, #tpu.memory_space<vmem>>, vector<16x512xf32>,
    %c0_5 = arith.constant 0 : index
    %c0_6 = arith.constant 0 : index
    %4 = vector.load %arg2[%c0_5, %c0_6] : memref<128x512xf32, #tpu.memory_space<vmem>>, vector<128x512xf32>
    %cst_7 = arith.constant 0.000000e+00 : f32
    %5 = vector.broadcast %cst_7 : f32 to vector<2x128xf32>
    %cst_8 = arith.constant 0.000000e+00 : f32
    %6 = vector.broadcast %cst_8 : f32 to vector<2x128xf32>
    %c0_9 = arith.constant 0 : index
    %c0_10 = arith.constant 0 : index
    %7 = vector.load %arg5[%c0_9, %c0_10] : memref<16x512xf32, #tpu.memory_space<vmem>>, vector<2x512xf32>
    %cst_11 = arith.constant dense<0.000000e+00> : vector<2x512xf32>
    %8 = tpu.matmul %5, %4, %cst_11 {dimension_numbers = #tpu.dot_dimension_numbers<[1], [0], [0], [1], [0, 0, 1, 1], [], []>} : vector<2x128xf32>, vector<128x512xf32>, vector<2x512xf32> -> vector<2x512xf32>
    %9 = arith.addf %7, %8 : vector<2x512xf32>
    %10 = vector.extract_strided_slice %9 {offsets = [0, 0], sizes = [2, 384], strides = [1, 1]} : vector<2x512xf32> to vector<2x384xf32>
    %cst_12 = arith.constant 5.000000e-01 : f32
    %11 = vector.broadcast %cst_12 : f32 to vector<2x384xf32>
    %12 = arith.mulf %11, %10 : vector<2x384xf32>
    %13 = math.tanh %12 : vector<2x384xf32>
    %cst_13 = arith.constant 5.000000e-01 : f32
    %14 = vector.broadcast %cst_13 : f32 to vector<2x384xf32>
    %15 = arith.mulf %14, %13 : vector<2x384xf32>
    %cst_14 = arith.constant 5.000000e-01 : f32
    %16 = vector.broadcast %cst_14 : f32 to vector<2x384xf32>
    %17 = arith.addf %15, %16 : vector<2x384xf32>
    %18 = vector.extract_strided_slice %17 {offsets = [0, 0], sizes = [2, 128], strides = [1, 1]} : vector<2x384xf32> to vector<2x128xf32>
    %19 = vector.extract_strided_slice %17 {offsets = [0, 128], sizes = [2, 128], strides = [1, 1]} : vector<2x384xf32> to vector<2x128xf32>
    %20 = vector.extract_strided_slice %17 {offsets = [0, 256], sizes = [2, 128], strides = [1, 1]} : vector<2x384xf32> to vector<2x128xf32>
    %21 = vector.extract_strided_slice %9 {offsets = [0, 384], sizes = [2, 128], strides = [1, 1]} : vector<2x512xf32> to vector<2x128xf32>
    %22 = math.tanh %21 : vector<2x128xf32>
    %23 = arith.mulf %19, %6 : vector<2x128xf32>
    %24 = arith.mulf %18, %22 : vector<2x128xf32>
    %25 = arith.addf %23, %24 : vector<2x128xf32>
    %26 = math.tanh %25 : vector<2x128xf32>
    %27 = arith.mulf %20, %26 : vector<2x128xf32>
    %c0_15 = arith.constant 0 : index
    %c0_16 = arith.constant 0 : index
    %28 = vector.load %arg6[%c0_15, %c0_16] : memref<16x128xf32, #tpu.memory_space<vmem>>, vector<2x128xf32>
    tpu.vector_store %arg6[%c0_15, %c0_16], %27 {strides = array<i32>} : memref<16x128xf32, #tpu.memory_space<vmem>>, vector<2x128xf32>,
    %c2 = arith.constant 2 : index
    %c0_17 = arith.constant 0 : index
    %29 = vector.load %arg5[%c2, %c0_17] : memref<16x512xf32, #tpu.memory_space<vmem>>, vector<2x512xf32>
    %cst_18 = arith.constant dense<0.000000e+00> : vector<2x512xf32>
    %30 = tpu.matmul %27, %4, %cst_18 {dimension_numbers = #tpu.dot_dimension_numbers<[1], [0], [0], [1], [0, 0, 1, 1], [], []>} : vector<2x128xf32>, vector<128x512xf32>, vector<2x512xf32> -> vector<2x512xf32>
    %31 = arith.addf %29, %30 : vector<2x512xf32>
    %32 = vector.extract_strided_slice %31 {offsets = [0, 0], sizes = [2, 384], strides = [1, 1]} : vector<2x512xf32> to vector<2x384xf32>
    %cst_19 = arith.constant 5.000000e-01 : f32
    %33 = vector.broadcast %cst_19 : f32 to vector<2x384xf32>
    %34 = arith.mulf %33, %32 : vector<2x384xf32>
    %35 = math.tanh %34 : vector<2x384xf32>
    %cst_20 = arith.constant 5.000000e-01 : f32
    %36 = vector.broadcast %cst_20 : f32 to vector<2x384xf32>
    %37 = arith.mulf %36, %35 : vector<2x384xf32>
    %cst_21 = arith.constant 5.000000e-01 : f32
    %38 = vector.broadcast %cst_21 : f32 to vector<2x384xf32>
    %39 = arith.addf %37, %38 : vector<2x384xf32>
    %40 = vector.extract_strided_slice %39 {offsets = [0, 0], sizes = [2, 128], strides = [1, 1]} : vector<2x384xf32> to vector<2x128xf32>
    %41 = vector.extract_strided_slice %39 {offsets = [0, 128], sizes = [2, 128], strides = [1, 1]} : vector<2x384xf32> to vector<2x128xf32>
    %42 = vector.extract_strided_slice %39 {offsets = [0, 256], sizes = [2, 128], strides = [1, 1]} : vector<2x384xf32> to vector<2x128xf32>
    %43 = vector.extract_strided_slice %31 {offsets = [0, 384], sizes = [2, 128], strides = [1, 1]} : vector<2x512xf32> to vector<2x128xf32>
    %44 = math.tanh %43 : vector<2x128xf32>
    %45 = arith.mulf %41, %25 : vector<2x128xf32>
    %46 = arith.mulf %40, %44 : vector<2x128xf32>
    %47 = arith.addf %45, %46 : vector<2x128xf32>
    %48 = math.tanh %47 : vector<2x128xf32>
    %49 = arith.mulf %42, %48 : vector<2x128xf32>
    %c2_22 = arith.constant 2 : index
    %c0_23 = arith.constant 0 : index
    %50 = vector.load %arg6[%c2_22, %c0_23] : memref<16x128xf32, #tpu.memory_space<vmem>>, vector<2x128xf32>
    tpu.vector_store %arg6[%c2_22, %c0_23], %49 {strides = array<i32>} : memref<16x128xf32, #tpu.memory_space<vmem>>, vector<2x128xf32>,
    %c4 = arith.constant 4 : index
    %c0_24 = arith.constant 0 : index
    %51 = vector.load %arg5[%c4, %c0_24] : memref<16x512xf32, #tpu.memory_space<vmem>>, vector<2x512xf32>
    %cst_25 = arith.constant dense<0.000000e+00> : vector<2x512xf32>
    %52 = tpu.matmul %49, %4, %cst_25 {dimension_numbers = #tpu.dot_dimension_numbers<[1], [0], [0], [1], [0, 0, 1, 1], [], []>} : vector<2x128xf32>, vector<128x512xf32>, vector<2x512xf32> -> vector<2x512xf32>
    %53 = arith.addf %51, %52 : vector<2x512xf32>
    %54 = vector.extract_strided_slice %53 {offsets = [0, 0], sizes = [2, 384], strides = [1, 1]} : vector<2x512xf32> to vector<2x384xf32>
    %cst_26 = arith.constant 5.000000e-01 : f32
    %55 = vector.broadcast %cst_26 : f32 to vector<2x384xf32>
    %56 = arith.mulf %55, %54 : vector<2x384xf32>
    %57 = math.tanh %56 : vector<2x384xf32>
    %cst_27 = arith.constant 5.000000e-01 : f32
    %58 = vector.broadcast %cst_27 : f32 to vector<2x384xf32>
    %59 = arith.mulf %58, %57 : vector<2x384xf32>
    %cst_28 = arith.constant 5.000000e-01 : f32
    %60 = vector.broadcast %cst_28 : f32 to vector<2x384xf32>
    %61 = arith.addf %59, %60 : vector<2x384xf32>
    %62 = vector.extract_strided_slice %61 {offsets = [0, 0], sizes = [2, 128], strides = [1, 1]} : vector<2x384xf32> to vector<2x128xf32>
    %63 = vector.extract_strided_slice %61 {offsets = [0, 128], sizes = [2, 128], strides = [1, 1]} : vector<2x384xf32> to vector<2x128xf32>
    %64 = vector.extract_strided_slice %61 {offsets = [0, 256], sizes = [2, 128], strides = [1, 1]} : vector<2x384xf32> to vector<2x128xf32>
    %65 = vector.extract_strided_slice %53 {offsets = [0, 384], sizes = [2, 128], strides = [1, 1]} : vector<2x512xf32> to vector<2x128xf32>
    %66 = math.tanh %65 : vector<2x128xf32>
    %67 = arith.mulf %63, %47 : vector<2x128xf32>
    %68 = arith.mulf %62, %66 : vector<2x128xf32>
    %69 = arith.addf %67, %68 : vector<2x128xf32>
    %70 = math.tanh %69 : vector<2x128xf32>
    %71 = arith.mulf %64, %70 : vector<2x128xf32>
    %c4_29 = arith.constant 4 : index
    %c0_30 = arith.constant 0 : index
    %72 = vector.load %arg6[%c4_29, %c0_30] : memref<16x128xf32, #tpu.memory_space<vmem>>, vector<2x128xf32>
    tpu.vector_store %arg6[%c4_29, %c0_30], %71 {strides = array<i32>} : memref<16x128xf32, #tpu.memory_space<vmem>>, vector<2x128xf32>,
    %c6 = arith.constant 6 : index
    %c0_31 = arith.constant 0 : index
    %73 = vector.load %arg5[%c6, %c0_31] : memref<16x512xf32, #tpu.memory_space<vmem>>, vector<2x512xf32>
    %cst_32 = arith.constant dense<0.000000e+00> : vector<2x512xf32>
    %74 = tpu.matmul %71, %4, %cst_32 {dimension_numbers = #tpu.dot_dimension_numbers<[1], [0], [0], [1], [0, 0, 1, 1], [], []>} : vector<2x128xf32>, vector<128x512xf32>, vector<2x512xf32> -> vector<2x512xf32>
    %75 = arith.addf %73, %74 : vector<2x512xf32>
    %76 = vector.extract_strided_slice %75 {offsets = [0, 0], sizes = [2, 384], strides = [1, 1]} : vector<2x512xf32> to vector<2x384xf32>
    %cst_33 = arith.constant 5.000000e-01 : f32
    %77 = vector.broadcast %cst_33 : f32 to vector<2x384xf32>
    %78 = arith.mulf %77, %76 : vector<2x384xf32>
    %79 = math.tanh %78 : vector<2x384xf32>
    %cst_34 = arith.constant 5.000000e-01 : f32
    %80 = vector.broadcast %cst_34 : f32 to vector<2x384xf32>
    %81 = arith.mulf %80, %79 : vector<2x384xf32>
    %cst_35 = arith.constant 5.000000e-01 : f32
    %82 = vector.broadcast %cst_35 : f32 to vector<2x384xf32>
    %83 = arith.addf %81, %82 : vector<2x384xf32>
    %84 = vector.extract_strided_slice %83 {offsets = [0, 0], sizes = [2, 128], strides = [1, 1]} : vector<2x384xf32> to vector<2x128xf32>
    %85 = vector.extract_strided_slice %83 {offsets = [0, 128], sizes = [2, 128], strides = [1, 1]} : vector<2x384xf32> to vector<2x128xf32>
    %86 = vector.extract_strided_slice %83 {offsets = [0, 256], sizes = [2, 128], strides = [1, 1]} : vector<2x384xf32> to vector<2x128xf32>
    %87 = vector.extract_strided_slice %75 {offsets = [0, 384], sizes = [2, 128], strides = [1, 1]} : vector<2x512xf32> to vector<2x128xf32>
    %88 = math.tanh %87 : vector<2x128xf32>
    %89 = arith.mulf %85, %69 : vector<2x128xf32>
    %90 = arith.mulf %84, %88 : vector<2x128xf32>
    %91 = arith.addf %89, %90 : vector<2x128xf32>
    %92 = math.tanh %91 : vector<2x128xf32>
    %93 = arith.mulf %86, %92 : vector<2x128xf32>
    %c6_36 = arith.constant 6 : index
    %c0_37 = arith.constant 0 : index
    %94 = vector.load %arg6[%c6_36, %c0_37] : memref<16x128xf32, #tpu.memory_space<vmem>>, vector<2x128xf32>
    tpu.vector_store %arg6[%c6_36, %c0_37], %93 {strides = array<i32>} : memref<16x128xf32, #tpu.memory_space<vmem>>, vector<2x128xf32>,
    %c8 = arith.constant 8 : index
    %c0_38 = arith.constant 0 : index
    %95 = vector.load %arg5[%c8, %c0_38] : memref<16x512xf32, #tpu.memory_space<vmem>>, vector<2x512xf32>
    %cst_39 = arith.constant dense<0.000000e+00> : vector<2x512xf32>
    %96 = tpu.matmul %93, %4, %cst_39 {dimension_numbers = #tpu.dot_dimension_numbers<[1], [0], [0], [1], [0, 0, 1, 1], [], []>} : vector<2x128xf32>, vector<128x512xf32>, vector<2x512xf32> -> vector<2x512xf32>
    %97 = arith.addf %95, %96 : vector<2x512xf32>
    %98 = vector.extract_strided_slice %97 {offsets = [0, 0], sizes = [2, 384], strides = [1, 1]} : vector<2x512xf32> to vector<2x384xf32>
    %cst_40 = arith.constant 5.000000e-01 : f32
    %99 = vector.broadcast %cst_40 : f32 to vector<2x384xf32>
    %100 = arith.mulf %99, %98 : vector<2x384xf32>
    %101 = math.tanh %100 : vector<2x384xf32>
    %cst_41 = arith.constant 5.000000e-01 : f32
    %102 = vector.broadcast %cst_41 : f32 to vector<2x384xf32>
    %103 = arith.mulf %102, %101 : vector<2x384xf32>
    %cst_42 = arith.constant 5.000000e-01 : f32
    %104 = vector.broadcast %cst_42 : f32 to vector<2x384xf32>
    %105 = arith.addf %103, %104 : vector<2x384xf32>
    %106 = vector.extract_strided_slice %105 {offsets = [0, 0], sizes = [2, 128], strides = [1, 1]} : vector<2x384xf32> to vector<2x128xf32>
    %107 = vector.extract_strided_slice %105 {offsets = [0, 128], sizes = [2, 128], strides = [1, 1]} : vector<2x384xf32> to vector<2x128xf32>
    %108 = vector.extract_strided_slice %105 {offsets = [0, 256], sizes = [2, 128], strides = [1, 1]} : vector<2x384xf32> to vector<2x128xf32>
    %109 = vector.extract_strided_slice %97 {offsets = [0, 384], sizes = [2, 128], strides = [1, 1]} : vector<2x512xf32> to vector<2x128xf32>
    %110 = math.tanh %109 : vector<2x128xf32>
    %111 = arith.mulf %107, %91 : vector<2x128xf32>
    %112 = arith.mulf %106, %110 : vector<2x128xf32>
    %113 = arith.addf %111, %112 : vector<2x128xf32>
    %114 = math.tanh %113 : vector<2x128xf32>
    %115 = arith.mulf %108, %114 : vector<2x128xf32>
    %c8_43 = arith.constant 8 : index
    %c0_44 = arith.constant 0 : index
    %116 = vector.load %arg6[%c8_43, %c0_44] : memref<16x128xf32, #tpu.memory_space<vmem>>, vector<2x128xf32>
    tpu.vector_store %arg6[%c8_43, %c0_44], %115 {strides = array<i32>} : memref<16x128xf32, #tpu.memory_space<vmem>>, vector<2x128xf32>,
    %c10 = arith.constant 10 : index
    %c0_45 = arith.constant 0 : index
    %117 = vector.load %arg5[%c10, %c0_45] : memref<16x512xf32, #tpu.memory_space<vmem>>, vector<2x512xf32>
    %cst_46 = arith.constant dense<0.000000e+00> : vector<2x512xf32>
    %118 = tpu.matmul %115, %4, %cst_46 {dimension_numbers = #tpu.dot_dimension_numbers<[1], [0], [0], [1], [0, 0, 1, 1], [], []>} : vector<2x128xf32>, vector<128x512xf32>, vector<2x512xf32> -> vector<2x512xf32>
    %119 = arith.addf %117, %118 : vector<2x512xf32>
    %120 = vector.extract_strided_slice %119 {offsets = [0, 0], sizes = [2, 384], strides = [1, 1]} : vector<2x512xf32> to vector<2x384xf32>
    %cst_47 = arith.constant 5.000000e-01 : f32
    %121 = vector.broadcast %cst_47 : f32 to vector<2x384xf32>
    %122 = arith.mulf %121, %120 : vector<2x384xf32>
    %123 = math.tanh %122 : vector<2x384xf32>
    %cst_48 = arith.constant 5.000000e-01 : f32
    %124 = vector.broadcast %cst_48 : f32 to vector<2x384xf32>
    %125 = arith.mulf %124, %123 : vector<2x384xf32>
    %cst_49 = arith.constant 5.000000e-01 : f32
    %126 = vector.broadcast %cst_49 : f32 to vector<2x384xf32>
    %127 = arith.addf %125, %126 : vector<2x384xf32>
    %128 = vector.extract_strided_slice %127 {offsets = [0, 0], sizes = [2, 128], strides = [1, 1]} : vector<2x384xf32> to vector<2x128xf32>
    %129 = vector.extract_strided_slice %127 {offsets = [0, 128], sizes = [2, 128], strides = [1, 1]} : vector<2x384xf32> to vector<2x128xf32>
    %130 = vector.extract_strided_slice %127 {offsets = [0, 256], sizes = [2, 128], strides = [1, 1]} : vector<2x384xf32> to vector<2x128xf32>
    %131 = vector.extract_strided_slice %119 {offsets = [0, 384], sizes = [2, 128], strides = [1, 1]} : vector<2x512xf32> to vector<2x128xf32>
    %132 = math.tanh %131 : vector<2x128xf32>
    %133 = arith.mulf %129, %113 : vector<2x128xf32>
    %134 = arith.mulf %128, %132 : vector<2x128xf32>
    %135 = arith.addf %133, %134 : vector<2x128xf32>
    %136 = math.tanh %135 : vector<2x128xf32>
    %137 = arith.mulf %130, %136 : vector<2x128xf32>
    %c10_50 = arith.constant 10 : index
    %c0_51 = arith.constant 0 : index
    %138 = vector.load %arg6[%c10_50, %c0_51] : memref<16x128xf32, #tpu.memory_space<vmem>>, vector<2x128xf32>
    tpu.vector_store %arg6[%c10_50, %c0_51], %137 {strides = array<i32>} : memref<16x128xf32, #tpu.memory_space<vmem>>, vector<2x128xf32>,
    %c12 = arith.constant 12 : index
    %c0_52 = arith.constant 0 : index
    %139 = vector.load %arg5[%c12, %c0_52] : memref<16x512xf32, #tpu.memory_space<vmem>>, vector<2x512xf32>
    %cst_53 = arith.constant dense<0.000000e+00> : vector<2x512xf32>
    %140 = tpu.matmul %137, %4, %cst_53 {dimension_numbers = #tpu.dot_dimension_numbers<[1], [0], [0], [1], [0, 0, 1, 1], [], []>} : vector<2x128xf32>, vector<128x512xf32>, vector<2x512xf32> -> vector<2x512xf32>
    %141 = arith.addf %139, %140 : vector<2x512xf32>
    %142 = vector.extract_strided_slice %141 {offsets = [0, 0], sizes = [2, 384], strides = [1, 1]} : vector<2x512xf32> to vector<2x384xf32>
    %cst_54 = arith.constant 5.000000e-01 : f32
    %143 = vector.broadcast %cst_54 : f32 to vector<2x384xf32>
    %144 = arith.mulf %143, %142 : vector<2x384xf32>
    %145 = math.tanh %144 : vector<2x384xf32>
    %cst_55 = arith.constant 5.000000e-01 : f32
    %146 = vector.broadcast %cst_55 : f32 to vector<2x384xf32>
    %147 = arith.mulf %146, %145 : vector<2x384xf32>
    %cst_56 = arith.constant 5.000000e-01 : f32
    %148 = vector.broadcast %cst_56 : f32 to vector<2x384xf32>
    %149 = arith.addf %147, %148 : vector<2x384xf32>
    %150 = vector.extract_strided_slice %149 {offsets = [0, 0], sizes = [2, 128], strides = [1, 1]} : vector<2x384xf32> to vector<2x128xf32>
    %151 = vector.extract_strided_slice %149 {offsets = [0, 128], sizes = [2, 128], strides = [1, 1]} : vector<2x384xf32> to vector<2x128xf32>
    %152 = vector.extract_strided_slice %149 {offsets = [0, 256], sizes = [2, 128], strides = [1, 1]} : vector<2x384xf32> to vector<2x128xf32>
    %153 = vector.extract_strided_slice %141 {offsets = [0, 384], sizes = [2, 128], strides = [1, 1]} : vector<2x512xf32> to vector<2x128xf32>
    %154 = math.tanh %153 : vector<2x128xf32>
    %155 = arith.mulf %151, %135 : vector<2x128xf32>
    %156 = arith.mulf %150, %154 : vector<2x128xf32>
    %157 = arith.addf %155, %156 : vector<2x128xf32>
    %158 = math.tanh %157 : vector<2x128xf32>
    %159 = arith.mulf %152, %158 : vector<2x128xf32>
    %c12_57 = arith.constant 12 : index
    %c0_58 = arith.constant 0 : index
    %160 = vector.load %arg6[%c12_57, %c0_58] : memref<16x128xf32, #tpu.memory_space<vmem>>, vector<2x128xf32>
    tpu.vector_store %arg6[%c12_57, %c0_58], %159 {strides = array<i32>} : memref<16x128xf32, #tpu.memory_space<vmem>>, vector<2x128xf32>,
    %c14 = arith.constant 14 : index
    %c0_59 = arith.constant 0 : index
    %161 = vector.load %arg5[%c14, %c0_59] : memref<16x512xf32, #tpu.memory_space<vmem>>, vector<2x512xf32>
    %cst_60 = arith.constant dense<0.000000e+00> : vector<2x512xf32>
    %162 = tpu.matmul %159, %4, %cst_60 {dimension_numbers = #tpu.dot_dimension_numbers<[1], [0], [0], [1], [0, 0, 1, 1], [], []>} : vector<2x128xf32>, vector<128x512xf32>, vector<2x512xf32> -> vector<2x512xf32>
    %163 = arith.addf %161, %162 : vector<2x512xf32>
    %164 = vector.extract_strided_slice %163 {offsets = [0, 0], sizes = [2, 384], strides = [1, 1]} : vector<2x512xf32> to vector<2x384xf32>
    %cst_61 = arith.constant 5.000000e-01 : f32
    %165 = vector.broadcast %cst_61 : f32 to vector<2x384xf32>
    %166 = arith.mulf %165, %164 : vector<2x384xf32>
    %167 = math.tanh %166 : vector<2x384xf32>
    %cst_62 = arith.constant 5.000000e-01 : f32
    %168 = vector.broadcast %cst_62 : f32 to vector<2x384xf32>
    %169 = arith.mulf %168, %167 : vector<2x384xf32>
    %cst_63 = arith.constant 5.000000e-01 : f32
    %170 = vector.broadcast %cst_63 : f32 to vector<2x384xf32>
    %171 = arith.addf %169, %170 : vector<2x384xf32>
    %172 = vector.extract_strided_slice %171 {offsets = [0, 0], sizes = [2, 128], strides = [1, 1]} : vector<2x384xf32> to vector<2x128xf32>
    %173 = vector.extract_strided_slice %171 {offsets = [0, 128], sizes = [2, 128], strides = [1, 1]} : vector<2x384xf32> to vector<2x128xf32>
    %174 = vector.extract_strided_slice %171 {offsets = [0, 256], sizes = [2, 128], strides = [1, 1]} : vector<2x384xf32> to vector<2x128xf32>
    %175 = vector.extract_strided_slice %163 {offsets = [0, 384], sizes = [2, 128], strides = [1, 1]} : vector<2x512xf32> to vector<2x128xf32>
    %176 = math.tanh %175 : vector<2x128xf32>
    %177 = arith.mulf %173, %157 : vector<2x128xf32>
    %178 = arith.mulf %172, %176 : vector<2x128xf32>
    %179 = arith.addf %177, %178 : vector<2x128xf32>
    %180 = math.tanh %179 : vector<2x128xf32>
    %181 = arith.mulf %174, %180 : vector<2x128xf32>
    %c14_64 = arith.constant 14 : index
    %c0_65 = arith.constant 0 : index
    %182 = vector.load %arg6[%c14_64, %c0_65] : memref<16x128xf32, #tpu.memory_space<vmem>>, vector<2x128xf32>
    tpu.vector_store %arg6[%c14_64, %c0_65], %181 {strides = array<i32>} : memref<16x128xf32, #tpu.memory_space<vmem>>, vector<2x128xf32>,
    %c0_66 = arith.constant 0 : index
    %c0_67 = arith.constant 0 : index
    %183 = vector.load %arg6[%c0_66, %c0_67] : memref<16x128xf32, #tpu.memory_space<vmem>>, vector<16x128xf32>
    %c0_68 = arith.constant 0 : index
    %c0_69 = arith.constant 0 : index
    %184 = vector.load %arg3[%c0_68, %c0_69] : memref<408x128xf32, #tpu.memory_space<vmem>>, vector<128x128xf32>
    %c128 = arith.constant 128 : index
    %c0_70 = arith.constant 0 : index
    %185 = vector.load %arg3[%c128, %c0_70] : memref<408x128xf32, #tpu.memory_space<vmem>>, vector<1x128xf32>
    %c136 = arith.constant 136 : index
    %c0_71 = arith.constant 0 : index
    %186 = vector.load %arg3[%c136, %c0_71] : memref<408x128xf32, #tpu.memory_space<vmem>>, vector<128x128xf32>
    %c264 = arith.constant 264 : index
    %c0_72 = arith.constant 0 : index
    %187 = vector.load %arg3[%c264, %c0_72] : memref<408x128xf32, #tpu.memory_space<vmem>>, vector<1x128xf32>
    %c272 = arith.constant 272 : index
    %c0_73 = arith.constant 0 : index
    %188 = vector.load %arg3[%c272, %c0_73] : memref<408x128xf32, #tpu.memory_space<vmem>>, vector<128x128xf32>
    %c400 = arith.constant 400 : index
    %c0_74 = arith.constant 0 : index
    %189 = vector.load %arg3[%c400, %c0_74] : memref<408x128xf32, #tpu.memory_space<vmem>>, vector<1x128xf32>
    %cst_75 = arith.constant dense<0.000000e+00> : vector<16x128xf32>
    %190 = tpu.matmul %183, %184, %cst_75 {dimension_numbers = #tpu.dot_dimension_numbers<[1], [0], [0], [1], [0, 0, 1, 1], [], []>} : vector<16x128xf32>, vector<128x128xf32>, vector<16x128xf32> -> vector<16x128xf32>
    %191 = vector.broadcast %185 : vector<1x128xf32> to vector<16x128xf32>
    %192 = arith.addf %190, %191 : vector<16x128xf32>
    %193 = vector.extract_strided_slice %192 {offsets = [0, 0], sizes = [2, 128], strides = [1, 1]} : vector<16x128xf32> to vector<2x128xf32>
    %194 = vector.extract_strided_slice %192 {offsets = [2, 0], sizes = [2, 128], strides = [1, 1]} : vector<16x128xf32> to vector<2x128xf32>
    %195 = arith.maximumf %193, %194 : vector<2x128xf32>
    %196 = vector.extract_strided_slice %192 {offsets = [4, 0], sizes = [2, 128], strides = [1, 1]} : vector<16x128xf32> to vector<2x128xf32>
    %197 = arith.maximumf %195, %196 : vector<2x128xf32>
    %198 = vector.extract_strided_slice %192 {offsets = [6, 0], sizes = [2, 128], strides = [1, 1]} : vector<16x128xf32> to vector<2x128xf32>
    %199 = arith.maximumf %197, %198 : vector<2x128xf32>
    %200 = vector.extract_strided_slice %192 {offsets = [8, 0], sizes = [2, 128], strides = [1, 1]} : vector<16x128xf32> to vector<2x128xf32>
    %201 = arith.maximumf %199, %200 : vector<2x128xf32>
    %202 = vector.extract_strided_slice %192 {offsets = [10, 0], sizes = [2, 128], strides = [1, 1]} : vector<16x128xf32> to vector<2x128xf32>
    %203 = arith.maximumf %201, %202 : vector<2x128xf32>
    %204 = vector.extract_strided_slice %192 {offsets = [12, 0], sizes = [2, 128], strides = [1, 1]} : vector<16x128xf32> to vector<2x128xf32>
    %205 = arith.maximumf %203, %204 : vector<2x128xf32>
    %206 = vector.extract_strided_slice %192 {offsets = [14, 0], sizes = [2, 128], strides = [1, 1]} : vector<16x128xf32> to vector<2x128xf32>
    %207 = arith.maximumf %205, %206 : vector<2x128xf32>
    %208 = tpu.concatenate %207, %207, %207, %207, %207, %207, %207, %207 in 0 : vector<2x128xf32>, vector<2x128xf32>, vector<2x128xf32>, vector<2x128xf32>, vector<2x128xf32>, vector<2x128xf32>, vector<2x128xf32>, vector<2x128xf32> -> vector<16x128xf32>
    %209 = arith.subf %192, %208 : vector<16x128xf32>
    %210 = math.exp %209 : vector<16x128xf32>
    %211 = vector.extract_strided_slice %210 {offsets = [0, 0], sizes = [2, 128], strides = [1, 1]} : vector<16x128xf32> to vector<2x128xf32>
    %212 = vector.extract_strided_slice %210 {offsets = [2, 0], sizes = [2, 128], strides = [1, 1]} : vector<16x128xf32> to vector<2x128xf32>
    %213 = arith.addf %211, %212 : vector<2x128xf32>
    %214 = vector.extract_strided_slice %210 {offsets = [4, 0], sizes = [2, 128], strides = [1, 1]} : vector<16x128xf32> to vector<2x128xf32>
    %215 = arith.addf %213, %214 : vector<2x128xf32>
    %216 = vector.extract_strided_slice %210 {offsets = [6, 0], sizes = [2, 128], strides = [1, 1]} : vector<16x128xf32> to vector<2x128xf32>
    %217 = arith.addf %215, %216 : vector<2x128xf32>
    %218 = vector.extract_strided_slice %210 {offsets = [8, 0], sizes = [2, 128], strides = [1, 1]} : vector<16x128xf32> to vector<2x128xf32>
    %219 = arith.addf %217, %218 : vector<2x128xf32>
    %220 = vector.extract_strided_slice %210 {offsets = [10, 0], sizes = [2, 128], strides = [1, 1]} : vector<16x128xf32> to vector<2x128xf32>
    %221 = arith.addf %219, %220 : vector<2x128xf32>
    %222 = vector.extract_strided_slice %210 {offsets = [12, 0], sizes = [2, 128], strides = [1, 1]} : vector<16x128xf32> to vector<2x128xf32>
    %223 = arith.addf %221, %222 : vector<2x128xf32>
    %224 = vector.extract_strided_slice %210 {offsets = [14, 0], sizes = [2, 128], strides = [1, 1]} : vector<16x128xf32> to vector<2x128xf32>
    %225 = arith.addf %223, %224 : vector<2x128xf32>
    %226 = tpu.reciprocal %225 {approx = true} : vector<2x128xf32> -> vector<2x128xf32>
    %227 = arith.mulf %225, %226 : vector<2x128xf32>
    %cst_76 = arith.constant 2.000000e+00 : f32
    %228 = vector.broadcast %cst_76 : f32 to vector<2x128xf32>
    %229 = arith.subf %228, %227 : vector<2x128xf32>
    %230 = arith.mulf %226, %229 : vector<2x128xf32>
    %231 = tpu.concatenate %230, %230, %230, %230, %230, %230, %230, %230 in 0 : vector<2x128xf32>, vector<2x128xf32>, vector<2x128xf32>, vector<2x128xf32>, vector<2x128xf32>, vector<2x128xf32>, vector<2x128xf32>, vector<2x128xf32> -> vector<16x128xf32>
    %232 = arith.mulf %210, %231 : vector<16x128xf32>
    %cst_77 = arith.constant dense<0.000000e+00> : vector<16x128xf32>
    %233 = tpu.matmul %232, %186, %cst_77 {dimension_numbers = #tpu.dot_dimension_numbers<[1], [0], [0], [1], [0, 0, 1, 1], [], []>} : vector<16x128xf32>, vector<128x128xf32>, vector<16x128xf32> -> vector<16x128xf32>
    %234 = vector.broadcast %187 : vector<1x128xf32> to vector<16x128xf32>
    %235 = arith.addf %233, %234 : vector<16x128xf32>
    %236 = vector.extract_strided_slice %235 {offsets = [0, 0], sizes = [2, 128], strides = [1, 1]} : vector<16x128xf32> to vector<2x128xf32>
    %237 = vector.extract_strided_slice %235 {offsets = [2, 0], sizes = [2, 128], strides = [1, 1]} : vector<16x128xf32> to vector<2x128xf32>
    %238 = arith.maximumf %236, %237 : vector<2x128xf32>
    %239 = vector.extract_strided_slice %235 {offsets = [4, 0], sizes = [2, 128], strides = [1, 1]} : vector<16x128xf32> to vector<2x128xf32>
    %240 = arith.maximumf %238, %239 : vector<2x128xf32>
    %241 = vector.extract_strided_slice %235 {offsets = [6, 0], sizes = [2, 128], strides = [1, 1]} : vector<16x128xf32> to vector<2x128xf32>
    %242 = arith.maximumf %240, %241 : vector<2x128xf32>
    %243 = vector.extract_strided_slice %235 {offsets = [8, 0], sizes = [2, 128], strides = [1, 1]} : vector<16x128xf32> to vector<2x128xf32>
    %244 = arith.maximumf %242, %243 : vector<2x128xf32>
    %245 = vector.extract_strided_slice %235 {offsets = [10, 0], sizes = [2, 128], strides = [1, 1]} : vector<16x128xf32> to vector<2x128xf32>
    %246 = arith.maximumf %244, %245 : vector<2x128xf32>
    %247 = vector.extract_strided_slice %235 {offsets = [12, 0], sizes = [2, 128], strides = [1, 1]} : vector<16x128xf32> to vector<2x128xf32>
    %248 = arith.maximumf %246, %247 : vector<2x128xf32>
    %249 = vector.extract_strided_slice %235 {offsets = [14, 0], sizes = [2, 128], strides = [1, 1]} : vector<16x128xf32> to vector<2x128xf32>
    %250 = arith.maximumf %248, %249 : vector<2x128xf32>
    %251 = tpu.concatenate %250, %250, %250, %250, %250, %250, %250, %250 in 0 : vector<2x128xf32>, vector<2x128xf32>, vector<2x128xf32>, vector<2x128xf32>, vector<2x128xf32>, vector<2x128xf32>, vector<2x128xf32>, vector<2x128xf32> -> vector<16x128xf32>
    %252 = arith.subf %235, %251 : vector<16x128xf32>
    %253 = math.exp %252 : vector<16x128xf32>
    %254 = vector.extract_strided_slice %253 {offsets = [0, 0], sizes = [2, 128], strides = [1, 1]} : vector<16x128xf32> to vector<2x128xf32>
    %255 = vector.extract_strided_slice %253 {offsets = [2, 0], sizes = [2, 128], strides = [1, 1]} : vector<16x128xf32> to vector<2x128xf32>
    %256 = arith.addf %254, %255 : vector<2x128xf32>
    %257 = vector.extract_strided_slice %253 {offsets = [4, 0], sizes = [2, 128], strides = [1, 1]} : vector<16x128xf32> to vector<2x128xf32>
    %258 = arith.addf %256, %257 : vector<2x128xf32>
    %259 = vector.extract_strided_slice %253 {offsets = [6, 0], sizes = [2, 128], strides = [1, 1]} : vector<16x128xf32> to vector<2x128xf32>
    %260 = arith.addf %258, %259 : vector<2x128xf32>
    %261 = vector.extract_strided_slice %253 {offsets = [8, 0], sizes = [2, 128], strides = [1, 1]} : vector<16x128xf32> to vector<2x128xf32>
    %262 = arith.addf %260, %261 : vector<2x128xf32>
    %263 = vector.extract_strided_slice %253 {offsets = [10, 0], sizes = [2, 128], strides = [1, 1]} : vector<16x128xf32> to vector<2x128xf32>
    %264 = arith.addf %262, %263 : vector<2x128xf32>
    %265 = vector.extract_strided_slice %253 {offsets = [12, 0], sizes = [2, 128], strides = [1, 1]} : vector<16x128xf32> to vector<2x128xf32>
    %266 = arith.addf %264, %265 : vector<2x128xf32>
    %267 = vector.extract_strided_slice %253 {offsets = [14, 0], sizes = [2, 128], strides = [1, 1]} : vector<16x128xf32> to vector<2x128xf32>
    %268 = arith.addf %266, %267 : vector<2x128xf32>
    %269 = tpu.reciprocal %268 {approx = true} : vector<2x128xf32> -> vector<2x128xf32>
    %270 = arith.mulf %268, %269 : vector<2x128xf32>
    %cst_78 = arith.constant 2.000000e+00 : f32
    %271 = vector.broadcast %cst_78 : f32 to vector<2x128xf32>
    %272 = arith.subf %271, %270 : vector<2x128xf32>
    %273 = arith.mulf %269, %272 : vector<2x128xf32>
    %274 = tpu.concatenate %273, %273, %273, %273, %273, %273, %273, %273 in 0 : vector<2x128xf32>, vector<2x128xf32>, vector<2x128xf32>, vector<2x128xf32>, vector<2x128xf32>, vector<2x128xf32>, vector<2x128xf32>, vector<2x128xf32> -> vector<16x128xf32>
    %275 = arith.mulf %253, %274 : vector<16x128xf32>
    %cst_79 = arith.constant dense<0.000000e+00> : vector<16x128xf32>
    %276 = tpu.matmul %275, %188, %cst_79 {dimension_numbers = #tpu.dot_dimension_numbers<[1], [0], [0], [1], [0, 0, 1, 1], [], []>} : vector<16x128xf32>, vector<128x128xf32>, vector<16x128xf32> -> vector<16x128xf32>
    %277 = vector.broadcast %189 : vector<1x128xf32> to vector<16x128xf32>
    %278 = arith.addf %276, %277 : vector<16x128xf32>
    %279 = vector.extract_strided_slice %278 {offsets = [0, 0], sizes = [16, 2], strides = [1, 1]} : vector<16x128xf32> to vector<16x2xf32>
    %cst_80 = arith.constant 5.000000e-01 : f32
    %280 = vector.broadcast %cst_80 : f32 to vector<16x2xf32>
    %281 = arith.mulf %280, %279 : vector<16x2xf32>
    %282 = math.tanh %281 : vector<16x2xf32>
    %cst_81 = arith.constant 5.000000e-01 : f32
    %283 = vector.broadcast %cst_81 : f32 to vector<16x2xf32>
    %284 = arith.mulf %283, %282 : vector<16x2xf32>
    %cst_82 = arith.constant 5.000000e-01 : f32
    %285 = vector.broadcast %cst_82 : f32 to vector<16x2xf32>
    %286 = arith.addf %284, %285 : vector<16x2xf32>
    %c0_83 = arith.constant 0 : index
    %c0_84 = arith.constant 0 : index
    %287 = vector.load %arg4[%c0_83, %c0_84] : memref<16x2xf32, #tpu.memory_space<vmem>>, vector<16x2xf32>
    tpu.vector_store %arg4[%c0_83, %c0_84], %286 {strides = array<i32>} : memref<16x2xf32, #tpu.memory_space<vmem>>, vector<16x2xf32>,
    return
  }
}

</mosaic_0001>

<llo_original>
// kernel: net_forward.1
$region0: #{net_forward.1}
  #allocation0 [shape = 'u32[]', space=smem, size = 0x4, offset = 0x4, fixed_abs, tag = 'smem constant byte address 0x4 - core index']
  #allocation1 [shape = 'u32[144,128]{1,0:T(1,128)}', space=vmem, size = 0x12000, scoped, tag = 'internal scratch']
  #allocation2 [shape = 'f32[16,512]{1,0:T(8,128)}', space=vmem, size = 0x8000, scoped, tag = 'scratch operand']
  #allocation3 [shape = 'f32[16,128]{1,0:T(8,128)}', space=vmem, size = 0x2000, scoped, tag = 'scratch operand']
  %s0 = inlined_call_operand.vmem [shape: f32[16,16], index: 0, kind: input, shape index: {}]
  %s1 = inlined_call_operand.hbm [shape: f32[16,512], index: 1, kind: input, shape index: {}]
  %s2 = inlined_call_operand.hbm [shape: f32[128,512], index: 2, kind: input, shape index: {}]
  %s3 = inlined_call_operand.hbm [shape: f32[408,128], index: 3, kind: input, shape index: {}]
  %s4 = inlined_call_operand.vmem [shape: f32[16,2], index: 4, kind: output, shape index: {}]
  %s5 = sld [smem:[#allocation0]]
  $region38: #{net_forward.1} parent=0
    _
  %s7 = ssub.s32 1, %s5
  %s8 = scalar_select 0, %s7, %s5
  $region1: #{net_forward.1} parent=0
    #allocation4 [shape = 'u8[32768]{0}', space=vmem, size = 0x8000, scoped, tag = 'input window, operand 1, single buffered']
    #allocation5 [shape = 's32[1]{0}', space=sflag, size = 0x4, scoped, tag = 'scoped memory for net_forward.1']
    #allocation6 [shape = 'u8[262144]{0}', space=vmem, size = 0x40000, scoped, tag = 'input window, operand 2, single buffered']
    #allocation7 [shape = 's32[1]{0}', space=sflag, size = 0x4, scoped, tag = 'scoped memory for net_forward.1']
    #allocation8 [shape = 'u8[208896]{0}', space=vmem, size = 0x33000, scoped, tag = 'input window, operand 3, single buffered']
    %9 = vsyncpa [#allocation5], 0
    %10 = vsyncpa [#allocation7], 0
    // Predicated region
    $region2: #{net_forward.1} parent=1 // pred_check
      _
    $region3: #{net_forward.1} parent=1 // pred_check_branch
      %12 = sbr.rel (0) target = $region5
    $region4: #{net_forward.1} parent=1 // pred_region
      _
    $region5: #{net_forward.1} parent=1 // pred_fallthru
      _
    // Predicated region
    $region6: #{net_forward.1} parent=1 // pred_check
      _
    $region7: #{net_forward.1} parent=1 // pred_check_branch
      %14 = sbr.rel (0) target = $region9
    $region8: #{net_forward.1} parent=1 // pred_region
      %s16 = ssub.s32 1024, 1024
      %17 = vsyncadd [#allocation5], %s16
      %s18 = sshll.u32 [#allocation4], 4
      %s19 = int_to_ptr.vmem [resolvable:$true] %s18
      %24 = dma.hbm_to_vmem [thread:$0]  %s1, 1024, %s19, [#allocation5], 512, 512, 32
    $region9: #{net_forward.1} parent=1 // pred_fallthru
      _
    // Predicated region
    $region10: #{net_forward.1} parent=1 // pred_check
      _
    $region11: #{net_forward.1} parent=1 // pred_check_branch
      %26 = sbr.rel (0) target = $region13
    $region12: #{net_forward.1} parent=1 // pred_region
      %s28 = ssub.s32 8192, 8192
      %29 = vsyncadd [#allocation7], %s28
      %s30 = sshll.u32 [#allocation6], 4
      %s31 = int_to_ptr.vmem [resolvable:$true] %s30
      %36 = dma.hbm_to_vmem [thread:$0]  %s2, 8192, %s31, [#allocation7], 512, 512, 32
    $region13: #{net_forward.1} parent=1 // pred_fallthru
      _
    // Predicated region
    $region14: #{net_forward.1} parent=1 // pred_check
      _
    $region15: #{net_forward.1} parent=1 // pred_check_branch
      %38 = sbr.rel (0) target = $region17
    $region16: #{net_forward.1} parent=1 // pred_region
      %s40 = ssub.s32 6528, 6528
      %41 = vsyncadd [#allocation7], %s40
      %s42 = sshll.u32 [#allocation8], 4
      %s43 = int_to_ptr.vmem [resolvable:$true] %s42
      %48 = dma.hbm_to_vmem [thread:$0]  %s3, 6528, %s43, [#allocation7], 128, 128, 8
    $region17: #{net_forward.1} parent=1 // pred_fallthru
      _
    // Predicated region
    $region18: #{net_forward.1} parent=1 // pred_check
      _
    $region19: #{net_forward.1} parent=1 // pred_check_branch
      %50 = sbr.rel (0) target = $region21
    $region20: #{net_forward.1} parent=1 // pred_region
      %51 = dma.done [#allocation5], 1024
    $region21: #{net_forward.1} parent=1 // pred_fallthru
      _
    // Predicated region
    $region22: #{net_forward.1} parent=1 // pred_check
      _
    $region23: #{net_forward.1} parent=1 // pred_check_branch
      %53 = sbr.rel (0) target = $region25
    $region24: #{net_forward.1} parent=1 // pred_region
      %54 = dma.done [#allocation7], 8192
    $region25: #{net_forward.1} parent=1 // pred_fallthru
      _
    // Predicated region
    $region26: #{net_forward.1} parent=1 // pred_check
      _
    $region27: #{net_forward.1} parent=1 // pred_check_branch
      %56 = sbr.rel (0) target = $region29
    $region28: #{net_forward.1} parent=1 // pred_region
      %57 = dma.done [#allocation7], 6528
    $region29: #{net_forward.1} parent=1 // pred_fallthru
      _
    %v58 = vld [vmem:[%s0] sm:$0xff]
    %v59 = vld [vmem:[%s0 + $0x8] sm:$0xff]
    %v60 = vld [vmem:[#allocation4] sm:$0xff]
    %v61 = vld [vmem:[#allocation4 + $0x8] sm:$0xff]
    %v62 = vld [vmem:[#allocation4 + $0x10] sm:$0xff]
    %v63 = vld [vmem:[#allocation4 + $0x18] sm:$0xff]
    %v64 = vld [vmem:[#allocation4 + $0x20] sm:$0xff]
    %v65 = vld [vmem:[#allocation4 + $0x28] sm:$0xff]
    %v66 = vld [vmem:[#allocation4 + $0x30] sm:$0xff]
    %v67 = vld [vmem:[#allocation4 + $0x38] sm:$0xff]
    %vm68 = vcmask 130048
    %v70 = vsel %vm68, %v58, 0
    %v73 = vsel %vm68, %v59, 0
    %75 = vmatprep.subr.mxu0 %v61
    %76 = vmatpush1.msra.mxu0 %v60
    %77 = vmatprep.subr.mxu0 %v65
    %78 = vmatpush1.msra.mxu0 %v64
    %79 = vmatprep.subr.mxu0 0.0
    %80 = vmatpush1.msra.mxu0 0.0
    %81 = vmatprep.subr.mxu0 0.0
    %82 = vmatpush1.msra.mxu0 0.0
    %83 = vmatprep.subr.mxu0 0.0
    %84 = vmatpush1.msra.mxu0 0.0
    %85 = vmatprep.subr.mxu0 0.0
    %86 = vmatpush1.msra.mxu0 0.0
    %87 = vmatprep.subr.mxu0 0.0
    %88 = vmatpush1.msra.mxu0 0.0
    %89 = vmatprep.subr.mxu0 0.0
    %90 = vmatpush1.msra.mxu0 0.0
    %91 = vmatprep.subr.mxu0 0.0
    %92 = vmatpush1.msra.mxu0 0.0
    %93 = vmatprep.subr.mxu0 0.0
    %94 = vmatpush1.msra.mxu0 0.0
    %95 = vmatprep.subr.mxu0 0.0
    %96 = vmatpush1.msra.mxu0 0.0
    %97 = vmatprep.subr.mxu0 0.0
    %98 = vmatpush1.msra.mxu0 0.0
    %99 = vmatprep.subr.mxu0 0.0
    %100 = vmatpush1.msra.mxu0 0.0
    %101 = vmatprep.subr.mxu0 0.0
    %102 = vmatpush1.msra.mxu0 0.0
    %103 = vmatprep.subr.mxu0 0.0
    %104 = vmatpush1.msra.mxu0 0.0
    %105 = vmatprep.subr.mxu0 0.0
    %106 = vmatpush1.msra.mxu0 0.0
    %107 = vmatprep.subr.mxu0 0.0
    %108 = vmatpush1.msra.mxu0 0.0
    %109 = vmatprep.subr.mxu0 0.0
    %110 = vmatpush1.msra.mxu0 0.0
    %111 = vmatprep.subr.mxu0 0.0
    %112 = vmatpush1.msra.mxu0 0.0
    %113 = vmatprep.subr.mxu0 0.0
    %114 = vmatpush1.msra.mxu0 0.0
    %115 = vmatprep.subr.mxu0 0.0
    %116 = vmatpush1.msra.mxu0 0.0
    %117 = vmatprep.subr.mxu0 0.0
    %118 = vmatpush1.msra.mxu0 0.0
    %119 = vmatprep.subr.mxu0 0.0
    %120 = vmatpush1.msra.mxu0 0.0
    %121 = vmatprep.subr.mxu0 0.0
    %122 = vmatpush1.msra.mxu0 0.0
    %123 = vmatprep.subr.mxu0 0.0
    %124 = vmatpush1.msra.mxu0 0.0
    %125 = vmatprep.subr.mxu0 0.0
    %126 = vmatpush1.msra.mxu0 0.0
    %127 = vmatprep.subr.mxu0 0.0
    %128 = vmatpush1.msra.mxu0 0.0
    %129 = vmatprep.subr.mxu0 0.0
    %130 = vmatpush1.msra.mxu0 0.0
    %131 = vmatprep.subr.mxu0 0.0
    %132 = vmatpush1.msra.mxu0 0.0
    %133 = vmatprep.subr.mxu0 0.0
    %134 = vmatpush1.msra.mxu0 0.0
    %135 = vmatprep.subr.mxu0 0.0
    %136 = vmatpush1.msra.mxu0 0.0
    %137 = vmatprep.subr.mxu0 0.0
    %138 = vmatpush1.msra.mxu0 0.0
    %139 = vmatprep.mubr.f32.mxu0 0.0
    %140 = vmatmul.mubr.f32.gmra.mrb[0].mxu0 %v70
    %v141 = vpop.f32.mrb[0].mxu0
    %v142 = vadd.f32 0.0, %v141
    %v143 = vpop.f32.mrb[0].mxu0
    %v144 = vadd.f32 0.0, %v143
    %145 = vmatprep.mubr.f32.mxu0 0.0
    %146 = vmatmul.mubr.f32.gmra.mrb[0].mxu0 %v73
    %v147 = vpop.f32.mrb[0].mxu0
    %v148 = vadd.f32 0.0, %v147
    %v149 = vpop.f32.mrb[0].mxu0
    %v150 = vadd.f32 0.0, %v149
    %151 = vdwg.mxu0
    %152 = vmatprep.subr.mxu0 %v63
    %153 = vmatpush1.msra.mxu0 %v62
    %154 = vmatprep.subr.mxu0 %v67
    %155 = vmatpush1.msra.mxu0 %v66
    %156 = vmatprep.subr.mxu0 0.0
    %157 = vmatpush1.msra.mxu0 0.0
    %158 = vmatprep.subr.mxu0 0.0
    %159 = vmatpush1.msra.mxu0 0.0
    %160 = vmatprep.subr.mxu0 0.0
    %161 = vmatpush1.msra.mxu0 0.0
    %162 = vmatprep.subr.mxu0 0.0
    %163 = vmatpush1.msra.mxu0 0.0
    %164 = vmatprep.subr.mxu0 0.0
    %165 = vmatpush1.msra.mxu0 0.0
    %166 = vmatprep.subr.mxu0 0.0
    %167 = vmatpush1.msra.mxu0 0.0
    %168 = vmatprep.subr.mxu0 0.0
    %169 = vmatpush1.msra.mxu0 0.0
    %170 = vmatprep.subr.mxu0 0.0
    %171 = vmatpush1.msra.mxu0 0.0
    %172 = vmatprep.subr.mxu0 0.0
    %173 = vmatpush1.msra.mxu0 0.0
    %174 = vmatprep.subr.mxu0 0.0
    %175 = vmatpush1.msra.mxu0 0.0
    %176 = vmatprep.subr.mxu0 0.0
    %177 = vmatpush1.msra.mxu0 0.0
    %178 = vmatprep.subr.mxu0 0.0
    %179 = vmatpush1.msra.mxu0 0.0
    %180 = vmatprep.subr.mxu0 0.0
    %181 = vmatpush1.msra.mxu0 0.0
    %182 = vmatprep.subr.mxu0 0.0
    %183 = vmatpush1.msra.mxu0 0.0
    %184 = vmatprep.subr.mxu0 0.0
    %185 = vmatpush1.msra.mxu0 0.0
    %186 = vmatprep.subr.mxu0 0.0
    %187 = vmatpush1.msra.mxu0 0.0
    %188 = vmatprep.subr.mxu0 0.0
    %189 = vmatpush1.msra.mxu0 0.0
    %190 = vmatprep.subr.mxu0 0.0
    %191 = vmatpush1.msra.mxu0 0.0
    %192 = vmatprep.subr.mxu0 0.0
    %193 = vmatpush1.msra.mxu0 0.0
    %194 = vmatprep.subr.mxu0 0.0
    %195 = vmatpush1.msra.mxu0 0.0
    %196 = vmatprep.subr.mxu0 0.0
    %197 = vmatpush1.msra.mxu0 0.0
    %198 = vmatprep.subr.mxu0 0.0
    %199 = vmatpush1.msra.mxu0 0.0
    %200 = vmatprep.subr.mxu0 0.0
    %201 = vmatpush1.msra.mxu0 0.0
    %202 = vmatprep.subr.mxu0 0.0
    %203 = vmatpush1.msra.mxu0 0.0
    %204 = vmatprep.subr.mxu0 0.0
    %205 = vmatpush1.msra.mxu0 0.0
    %206 = vmatprep.subr.mxu0 0.0
    %207 = vmatpush1.msra.mxu0 0.0
    %208 = vmatprep.subr.mxu0 0.0
    %209 = vmatpush1.msra.mxu0 0.0
    %210 = vmatprep.subr.mxu0 0.0
    %211 = vmatpush1.msra.mxu0 0.0
    %212 = vmatprep.subr.mxu0 0.0
    %213 = vmatpush1.msra.mxu0 0.0
    %214 = vmatprep.subr.mxu0 0.0
    %215 = vmatpush1.msra.mxu0 0.0
    %216 = vmatprep.mubr.f32.mxu0 0.0
    %217 = vmatmul.mubr.f32.gmra.mrb[0].mxu0 %v70
    %v218 = vpop.f32.mrb[0].mxu0
    %v219 = vadd.f32 0.0, %v218
    %v220 = vpop.f32.mrb[0].mxu0
    %v221 = vadd.f32 0.0, %v220
    %222 = vmatprep.mubr.f32.mxu0 0.0
    %223 = vmatmul.mubr.f32.gmra.mrb[0].mxu0 %v73
    %v224 = vpop.f32.mrb[0].mxu0
    %v225 = vadd.f32 0.0, %v224
    %v226 = vpop.f32.mrb[0].mxu0
    %v227 = vadd.f32 0.0, %v226
    %228 = vdwg.mxu0
    %229 = vst [vmem:[#allocation2] sm:$0xff] %v142
    %230 = vst [vmem:[#allocation2 + $0x8] sm:$0xff] %v144
    %231 = vst [vmem:[#allocation2 + $0x10] sm:$0xff] %v219
    %232 = vst [vmem:[#allocation2 + $0x18] sm:$0xff] %v221
    %233 = vst [vmem:[#allocation2 + $0x20] sm:$0xff] %v148
    %234 = vst [vmem:[#allocation2 + $0x28] sm:$0xff] %v150
    %235 = vst [vmem:[#allocation2 + $0x30] sm:$0xff] %v225
    %236 = vst [vmem:[#allocation2 + $0x38] sm:$0xff] %v227
    %v237 = vld [vmem:[#allocation6] sm:$0xff]
    %v238 = vld [vmem:[#allocation6 + $0x8] sm:$0xff]
    %v239 = vld [vmem:[#allocation6 + $0x10] sm:$0xff]
    %v240 = vld [vmem:[#allocation6 + $0x18] sm:$0xff]
    %v241 = vld [vmem:[#allocation6 + $0x20] sm:$0xff]
    %v242 = vld [vmem:[#allocation6 + $0x28] sm:$0xff]
    %v243 = vld [vmem:[#allocation6 + $0x30] sm:$0xff]
    %v244 = vld [vmem:[#allocation6 + $0x38] sm:$0xff]
    %v245 = vld [vmem:[#allocation6 + $0x40] sm:$0xff]
    %v246 = vld [vmem:[#allocation6 + $0x48] sm:$0xff]
    %v247 = vld [vmem:[#allocation6 + $0x50] sm:$0xff]
    %v248 = vld [vmem:[#allocation6 + $0x58] sm:$0xff]
    %v249 = vld [vmem:[#allocation6 + $0x60] sm:$0xff]
    %v250 = vld [vmem:[#allocation6 + $0x68] sm:$0xff]
    %v251 = vld [vmem:[#allocation6 + $0x70] sm:$0xff]
    %v252 = vld [vmem:[#allocation6 + $0x78] sm:$0xff]
    %v253 = vld [vmem:[#allocation6 + $0x80] sm:$0xff]
    %v254 = vld [vmem:[#allocation6 + $0x88] sm:$0xff]
    %v255 = vld [vmem:[#allocation6 + $0x90] sm:$0xff]
    %v256 = vld [vmem:[#allocation6 + $0x98] sm:$0xff]
    %v257 = vld [vmem:[#allocation6 + $0xa0] sm:$0xff]
    %v258 = vld [vmem:[#allocation6 + $0xa8] sm:$0xff]
    %v259 = vld [vmem:[#allocation6 + $0xb0] sm:$0xff]
    %v260 = vld [vmem:[#allocation6 + $0xb8] sm:$0xff]
    %v261 = vld [vmem:[#allocation6 + $0xc0] sm:$0xff]
    %v262 = vld [vmem:[#allocation6 + $0xc8] sm:$0xff]
    %v263 = vld [vmem:[#allocation6 + $0xd0] sm:$0xff]
    %v264 = vld [vmem:[#allocation6 + $0xd8] sm:$0xff]
    %v265 = vld [vmem:[#allocation6 + $0xe0] sm:$0xff]
    %v266 = vld [vmem:[#allocation6 + $0xe8] sm:$0xff]
    %v267 = vld [vmem:[#allocation6 + $0xf0] sm:$0xff]
    %v268 = vld [vmem:[#allocation6 + $0xf8] sm:$0xff]
    %v269 = vld [vmem:[#allocation6 + $0x100] sm:$0xff]
    %v270 = vld [vmem:[#allocation6 + $0x108] sm:$0xff]
    %v271 = vld [vmem:[#allocation6 + $0x110] sm:$0xff]
    %v272 = vld [vmem:[#allocation6 + $0x118] sm:$0xff]
    %v273 = vld [vmem:[#allocation6 + $0x120] sm:$0xff]
    %v274 = vld [vmem:[#allocation6 + $0x128] sm:$0xff]
    %v275 = vld [vmem:[#allocation6 + $0x130] sm:$0xff]
    %v276 = vld [vmem:[#allocation6 + $0x138] sm:$0xff]
    %v277 = vld [vmem:[#allocation6 + $0x140] sm:$0xff]
    %v278 = vld [vmem:[#allocation6 + $0x148] sm:$0xff]
    %v279 = vld [vmem:[#allocation6 + $0x150] sm:$0xff]
    %v280 = vld [vmem:[#allocation6 + $0x158] sm:$0xff]
    %v281 = vld [vmem:[#allocation6 + $0x160] sm:$0xff]
    %v282 = vld [vmem:[#allocation6 + $0x168] sm:$0xff]
    %v283 = vld [vmem:[#allocation6 + $0x170] sm:$0xff]
    %v284 = vld [vmem:[#allocation6 + $0x178] sm:$0xff]
    %v285 = vld [vmem:[#allocation6 + $0x180] sm:$0xff]
    %v286 = vld [vmem:[#allocation6 + $0x188] sm:$0xff]
    %v287 = vld [vmem:[#allocation6 + $0x190] sm:$0xff]
    %v288 = vld [vmem:[#allocation6 + $0x198] sm:$0xff]
    %v289 = vld [vmem:[#allocation6 + $0x1a0] sm:$0xff]
    %v290 = vld [vmem:[#allocation6 + $0x1a8] sm:$0xff]
    %v291 = vld [vmem:[#allocation6 + $0x1b0] sm:$0xff]
    %v292 = vld [vmem:[#allocation6 + $0x1b8] sm:$0xff]
    %v293 = vld [vmem:[#allocation6 + $0x1c0] sm:$0xff]
    %v294 = vld [vmem:[#allocation6 + $0x1c8] sm:$0xff]
    %v295 = vld [vmem:[#allocation6 + $0x1d0] sm:$0xff]
    %v296 = vld [vmem:[#allocation6 + $0x1d8] sm:$0xff]
    %v297 = vld [vmem:[#allocation6 + $0x1e0] sm:$0xff]
    %v298 = vld [vmem:[#allocation6 + $0x1e8] sm:$0xff]
    %v299 = vld [vmem:[#allocation6 + $0x1f0] sm:$0xff]
    %v300 = vld [vmem:[#allocation6 + $0x1f8] sm:$0xff]
    %v301 = vld [vmem:[#allocation2] sm:$0x3]
    %v302 = vld [vmem:[#allocation2 + $0x8] sm:$0x3]
    %v303 = vld [vmem:[#allocation2 + $0x10] sm:$0x3]
    %v304 = vld [vmem:[#allocation2 + $0x18] sm:$0x3]
    %305 = vmatprep.subr.mxu0 %v238
    %306 = vmatpush1.msra.mxu0 %v237
    %307 = vmatprep.subr.mxu0 %v242
    %308 = vmatpush1.msra.mxu0 %v241
    %309 = vmatprep.subr.mxu0 %v246
    %310 = vmatpush1.msra.mxu0 %v245
    %311 = vmatprep.subr.mxu0 %v250
    %312 = vmatpush1.msra.mxu0 %v249
    %313 = vmatprep.subr.mxu0 %v254
    %314 = vmatpush1.msra.mxu0 %v253
    %315 = vmatprep.subr.mxu0 %v258
    %316 = vmatpush1.msra.mxu0 %v257
    %317 = vmatprep.subr.mxu0 %v262
    %318 = vmatpush1.msra.mxu0 %v261
    %319 = vmatprep.subr.mxu0 %v266
    %320 = vmatpush1.msra.mxu0 %v265
    %321 = vmatprep.subr.mxu0 %v270
    %322 = vmatpush1.msra.mxu0 %v269
    %323 = vmatprep.subr.mxu0 %v274
    %324 = vmatpush1.msra.mxu0 %v273
    %325 = vmatprep.subr.mxu0 %v278
    %326 = vmatpush1.msra.mxu0 %v277
    %327 = vmatprep.subr.mxu0 %v282
    %328 = vmatpush1.msra.mxu0 %v281
    %329 = vmatprep.subr.mxu0 %v286
    %330 = vmatpush1.msra.mxu0 %v285
    %331 = vmatprep.subr.mxu0 %v290
    %332 = vmatpush1.msra.mxu0 %v289
    %333 = vmatprep.subr.mxu0 %v294
    %334 = vmatpush1.msra.mxu0 %v293
    %335 = vmatprep.subr.mxu0 %v298
    %336 = vmatpush1.msra.mxu0 %v297
    %337 = vmatprep.subr.mxu0 0.0
    %338 = vmatpush1.msra.mxu0 0.0
    %339 = vmatprep.subr.mxu0 0.0
    %340 = vmatpush1.msra.mxu0 0.0
    %341 = vmatprep.subr.mxu0 0.0
    %342 = vmatpush1.msra.mxu0 0.0
    %343 = vmatprep.subr.mxu0 0.0
    %344 = vmatpush1.msra.mxu0 0.0
    %345 = vmatprep.subr.mxu0 0.0
    %346 = vmatpush1.msra.mxu0 0.0
    %347 = vmatprep.subr.mxu0 0.0
    %348 = vmatpush1.msra.mxu0 0.0
    %349 = vmatprep.subr.mxu0 0.0
    %350 = vmatpush1.msra.mxu0 0.0
    %351 = vmatprep.subr.mxu0 0.0
    %352 = vmatpush1.msra.mxu0 0.0
    %353 = vmatprep.subr.mxu0 0.0
    %354 = vmatpush1.msra.mxu0 0.0
    %355 = vmatprep.subr.mxu0 0.0
    %356 = vmatpush1.msra.mxu0 0.0
    %357 = vmatprep.subr.mxu0 0.0
    %358 = vmatpush1.msra.mxu0 0.0
    %359 = vmatprep.subr.mxu0 0.0
    %360 = vmatpush1.msra.mxu0 0.0
    %361 = vmatprep.subr.mxu0 0.0
    %362 = vmatpush1.msra.mxu0 0.0
    %363 = vmatprep.subr.mxu0 0.0
    %364 = vmatpush1.msra.mxu0 0.0
    %365 = vmatprep.subr.mxu0 0.0
    %366 = vmatpush1.msra.mxu0 0.0
    %367 = vmatprep.subr.mxu0 0.0
    %368 = vmatpush1.msra.mxu0 0.0
    %369 = vmatprep.mubr.f32.mxu0 0.0
    %370 = vmatmul.mubr.f32.gmra.mrb[0].mxu0 0.0
    %v371 = vpop.f32.mrb[0].mxu0
    %v372 = vadd.f32 0.0, %v371
    %v373 = vpop.f32.mrb[0].mxu0
    %v374 = vadd.f32 0.0, %v373
    %375 = vdwg.mxu0
    %376 = vmatprep.subr.mxu0 %v240
    %377 = vmatpush1.msra.mxu0 %v239
    %378 = vmatprep.subr.mxu0 %v244
    %379 = vmatpush1.msra.mxu0 %v243
    %380 = vmatprep.subr.mxu0 %v248
    %381 = vmatpush1.msra.mxu0 %v247
    %382 = vmatprep.subr.mxu0 %v252
    %383 = vmatpush1.msra.mxu0 %v251
    %384 = vmatprep.subr.mxu0 %v256
    %385 = vmatpush1.msra.mxu0 %v255
    %386 = vmatprep.subr.mxu0 %v260
    %387 = vmatpush1.msra.mxu0 %v259
    %388 = vmatprep.subr.mxu0 %v264
    %389 = vmatpush1.msra.mxu0 %v263
    %390 = vmatprep.subr.mxu0 %v268
    %391 = vmatpush1.msra.mxu0 %v267
    %392 = vmatprep.subr.mxu0 %v272
    %393 = vmatpush1.msra.mxu0 %v271
    %394 = vmatprep.subr.mxu0 %v276
    %395 = vmatpush1.msra.mxu0 %v275
    %396 = vmatprep.subr.mxu0 %v280
    %397 = vmatpush1.msra.mxu0 %v279
    %398 = vmatprep.subr.mxu0 %v284
    %399 = vmatpush1.msra.mxu0 %v283
    %400 = vmatprep.subr.mxu0 %v288
    %401 = vmatpush1.msra.mxu0 %v287
    %402 = vmatprep.subr.mxu0 %v292
    %403 = vmatpush1.msra.mxu0 %v291
    %404 = vmatprep.subr.mxu0 %v296
    %405 = vmatpush1.msra.mxu0 %v295
    %406 = vmatprep.subr.mxu0 %v300
    %407 = vmatpush1.msra.mxu0 %v299
    %408 = vmatprep.subr.mxu0 0.0
    %409 = vmatpush1.msra.mxu0 0.0
    %410 = vmatprep.subr.mxu0 0.0
    %411 = vmatpush1.msra.mxu0 0.0
    %412 = vmatprep.subr.mxu0 0.0
    %413 = vmatpush1.msra.mxu0 0.0
    %414 = vmatprep.subr.mxu0 0.0
    %415 = vmatpush1.msra.mxu0 0.0
    %416 = vmatprep.subr.mxu0 0.0
    %417 = vmatpush1.msra.mxu0 0.0
    %418 = vmatprep.subr.mxu0 0.0
    %419 = vmatpush1.msra.mxu0 0.0
    %420 = vmatprep.subr.mxu0 0.0
    %421 = vmatpush1.msra.mxu0 0.0
    %422 = vmatprep.subr.mxu0 0.0
    %423 = vmatpush1.msra.mxu0 0.0
    %424 = vmatprep.subr.mxu0 0.0
    %425 = vmatpush1.msra.mxu0 0.0
    %426 = vmatprep.subr.mxu0 0.0
    %427 = vmatpush1.msra.mxu0 0.0
    %428 = vmatprep.subr.mxu0 0.0
    %429 = vmatpush1.msra.mxu0 0.0
    %430 = vmatprep.subr.mxu0 0.0
    %431 = vmatpush1.msra.mxu0 0.0
    %432 = vmatprep.subr.mxu0 0.0
    %433 = vmatpush1.msra.mxu0 0.0
    %434 = vmatprep.subr.mxu0 0.0
    %435 = vmatpush1.msra.mxu0 0.0
    %436 = vmatprep.subr.mxu0 0.0
    %437 = vmatpush1.msra.mxu0 0.0
    %438 = vmatprep.subr.mxu0 0.0
    %439 = vmatpush1.msra.mxu0 0.0
    %440 = vmatprep.mubr.f32.mxu0 0.0
    %441 = vmatmul.mubr.f32.gmra.mrb[0].mxu0 0.0
    %v442 = vpop.f32.mrb[0].mxu0
    %v443 = vadd.f32 0.0, %v442
    %v444 = vpop.f32.mrb[0].mxu0
    %v445 = vadd.f32 0.0, %v444
    %446 = vdwg.mxu0
    %v447 = vadd.f32 %v301, %v372
    %v448 = vadd.f32 %v302, %v374
    %v449 = vadd.f32 %v303, %v443
    %v450 = vadd.f32 %v304, %v445
    %v451 = vmul.f32 %v447, 0.5
    %v452 = vmul.f32 %v448, 0.5
    %v453 = vmul.f32 %v449, 0.5
    %v454 = vtanh.pop %v451
    %v455 = vtanh.pop %v452
    %v456 = vtanh.pop %v453
    %v457 = vmul.f32 %v454, 0.5
    %v458 = vmul.f32 %v455, 0.5
    %v459 = vmul.f32 %v456, 0.5
    %v460 = vadd.f32 %v457, 0.5
    %v461 = vadd.f32 %v458, 0.5
    %v462 = vadd.f32 %v459, 0.5
    %v463 = vtanh.pop %v450
    %v464 = vmul.f32 %v461, 0.0
    %v465 = vmul.f32 %v460, %v463
    %v466 = vadd.f32 %v464, %v465
    %v467 = vtanh.pop %v466
    %v468 = vmul.f32 %v462, %v467
    %469 = vst [vmem:[#allocation3] sm:$0x3] %v468
    %v470 = vld [vmem:[#allocation2] sm:$0xc]
    %v471 = vld [vmem:[#allocation2 + $0x8] sm:$0xc]
    %v472 = vld [vmem:[#allocation2 + $0x10] sm:$0xc]
    %v473 = vld [vmem:[#allocation2 + $0x18] sm:$0xc]
    %474 = vmatprep.subr.mxu0 %v238
    %475 = vmatpush1.msra.mxu0 %v237
    %476 = vmatprep.subr.mxu0 %v242
    %477 = vmatpush1.msra.mxu0 %v241
    %478 = vmatprep.subr.mxu0 %v246
    %479 = vmatpush1.msra.mxu0 %v245
    %480 = vmatprep.subr.mxu0 %v250
    %481 = vmatpush1.msra.mxu0 %v249
    %482 = vmatprep.subr.mxu0 %v254
    %483 = vmatpush1.msra.mxu0 %v253
    %484 = vmatprep.subr.mxu0 %v258
    %485 = vmatpush1.msra.mxu0 %v257
    %486 = vmatprep.subr.mxu0 %v262
    %487 = vmatpush1.msra.mxu0 %v261
    %488 = vmatprep.subr.mxu0 %v266
    %489 = vmatpush1.msra.mxu0 %v265
    %490 = vmatprep.subr.mxu0 %v270
    %491 = vmatpush1.msra.mxu0 %v269
    %492 = vmatprep.subr.mxu0 %v274
    %493 = vmatpush1.msra.mxu0 %v273
    %494 = vmatprep.subr.mxu0 %v278
    %495 = vmatpush1.msra.mxu0 %v277
    %496 = vmatprep.subr.mxu0 %v282
    %497 = vmatpush1.msra.mxu0 %v281
    %498 = vmatprep.subr.mxu0 %v286
    %499 = vmatpush1.msra.mxu0 %v285
    %500 = vmatprep.subr.mxu0 %v290
    %501 = vmatpush1.msra.mxu0 %v289
    %502 = vmatprep.subr.mxu0 %v294
    %503 = vmatpush1.msra.mxu0 %v293
    %504 = vmatprep.subr.mxu0 %v298
    %505 = vmatpush1.msra.mxu0 %v297
    %506 = vmatprep.subr.mxu0 0.0
    %507 = vmatpush1.msra.mxu0 0.0
    %508 = vmatprep.subr.mxu0 0.0
    %509 = vmatpush1.msra.mxu0 0.0
    %510 = vmatprep.subr.mxu0 0.0
    %511 = vmatpush1.msra.mxu0 0.0
    %512 = vmatprep.subr.mxu0 0.0
    %513 = vmatpush1.msra.mxu0 0.0
    %514 = vmatprep.subr.mxu0 0.0
    %515 = vmatpush1.msra.mxu0 0.0
    %516 = vmatprep.subr.mxu0 0.0
    %517 = vmatpush1.msra.mxu0 0.0
    %518 = vmatprep.subr.mxu0 0.0
    %519 = vmatpush1.msra.mxu0 0.0
    %520 = vmatprep.subr.mxu0 0.0
    %521 = vmatpush1.msra.mxu0 0.0
    %522 = vmatprep.subr.mxu0 0.0
    %523 = vmatpush1.msra.mxu0 0.0
    %524 = vmatprep.subr.mxu0 0.0
    %525 = vmatpush1.msra.mxu0 0.0
    %526 = vmatprep.subr.mxu0 0.0
    %527 = vmatpush1.msra.mxu0 0.0
    %528 = vmatprep.subr.mxu0 0.0
    %529 = vmatpush1.msra.mxu0 0.0
    %530 = vmatprep.subr.mxu0 0.0
    %531 = vmatpush1.msra.mxu0 0.0
    %532 = vmatprep.subr.mxu0 0.0
    %533 = vmatpush1.msra.mxu0 0.0
    %534 = vmatprep.subr.mxu0 0.0
    %535 = vmatpush1.msra.mxu0 0.0
    %536 = vmatprep.subr.mxu0 0.0
    %537 = vmatpush1.msra.mxu0 0.0
    %538 = vmatprep.mubr.f32.mxu0 0.0
    %539 = vmatmul.mubr.f32.gmra.mrb[0].mxu0 %v468
    %v540 = vpop.f32.mrb[0].mxu0
    %v541 = vadd.f32 0.0, %v540
    %v542 = vpop.f32.mrb[0].mxu0
    %v543 = vadd.f32 0.0, %v542
    %544 = vdwg.mxu0
    %545 = vmatprep.subr.mxu0 %v240
    %546 = vmatpush1.msra.mxu0 %v239
    %547 = vmatprep.subr.mxu0 %v244
    %548 = vmatpush1.msra.mxu0 %v243
    %549 = vmatprep.subr.mxu0 %v248
    %550 = vmatpush1.msra.mxu0 %v247
    %551 = vmatprep.subr.mxu0 %v252
    %552 = vmatpush1.msra.mxu0 %v251
    %553 = vmatprep.subr.mxu0 %v256
    %554 = vmatpush1.msra.mxu0 %v255
    %555 = vmatprep.subr.mxu0 %v260
    %556 = vmatpush1.msra.mxu0 %v259
    %557 = vmatprep.subr.mxu0 %v264
    %558 = vmatpush1.msra.mxu0 %v263
    %559 = vmatprep.subr.mxu0 %v268
    %560 = vmatpush1.msra.mxu0 %v267
    %561 = vmatprep.subr.mxu0 %v272
    %562 = vmatpush1.msra.mxu0 %v271
    %563 = vmatprep.subr.mxu0 %v276
    %564 = vmatpush1.msra.mxu0 %v275
    %565 = vmatprep.subr.mxu0 %v280
    %566 = vmatpush1.msra.mxu0 %v279
    %567 = vmatprep.subr.mxu0 %v284
    %568 = vmatpush1.msra.mxu0 %v283
    %569 = vmatprep.subr.mxu0 %v288
    %570 = vmatpush1.msra.mxu0 %v287
    %571 = vmatprep.subr.mxu0 %v292
    %572 = vmatpush1.msra.mxu0 %v291
    %573 = vmatprep.subr.mxu0 %v296
    %574 = vmatpush1.msra.mxu0 %v295
    %575 = vmatprep.subr.mxu0 %v300
    %576 = vmatpush1.msra.mxu0 %v299
    %577 = vmatprep.subr.mxu0 0.0
    %578 = vmatpush1.msra.mxu0 0.0
    %579 = vmatprep.subr.mxu0 0.0
    %580 = vmatpush1.msra.mxu0 0.0
    %581 = vmatprep.subr.mxu0 0.0
    %582 = vmatpush1.msra.mxu0 0.0
    %583 = vmatprep.subr.mxu0 0.0
    %584 = vmatpush1.msra.mxu0 0.0
    %585 = vmatprep.subr.mxu0 0.0
    %586 = vmatpush1.msra.mxu0 0.0
    %587 = vmatprep.subr.mxu0 0.0
    %588 = vmatpush1.msra.mxu0 0.0
    %589 = vmatprep.subr.mxu0 0.0
    %590 = vmatpush1.msra.mxu0 0.0
    %591 = vmatprep.subr.mxu0 0.0
    %592 = vmatpush1.msra.mxu0 0.0
    %593 = vmatprep.subr.mxu0 0.0
    %594 = vmatpush1.msra.mxu0 0.0
    %595 = vmatprep.subr.mxu0 0.0
    %596 = vmatpush1.msra.mxu0 0.0
    %597 = vmatprep.subr.mxu0 0.0
    %598 = vmatpush1.msra.mxu0 0.0
    %599 = vmatprep.subr.mxu0 0.0
    %600 = vmatpush1.msra.mxu0 0.0
    %601 = vmatprep.subr.mxu0 0.0
    %602 = vmatpush1.msra.mxu0 0.0
    %603 = vmatprep.subr.mxu0 0.0
    %604 = vmatpush1.msra.mxu0 0.0
    %605 = vmatprep.subr.mxu0 0.0
    %606 = vmatpush1.msra.mxu0 0.0
    %607 = vmatprep.subr.mxu0 0.0
    %608 = vmatpush1.msra.mxu0 0.0
    %609 = vmatprep.mubr.f32.mxu0 0.0
    %610 = vmatmul.mubr.f32.gmra.mrb[0].mxu0 %v468
    %v611 = vpop.f32.mrb[0].mxu0
    %v612 = vadd.f32 0.0, %v611
    %v613 = vpop.f32.mrb[0].mxu0
    %v614 = vadd.f32 0.0, %v613
    %615 = vdwg.mxu0
    %v620 = vrot.slane %v541, 6
    %v621 = vrot.slane %v543, 6
    %v622 = vrot.slane %v612, 6
    %v623 = vrot.slane %v614, 6
    %v628 = vadd.f32 %v470, %v620
    %v629 = vadd.f32 %v471, %v621
    %v630 = vadd.f32 %v472, %v622
    %v631 = vadd.f32 %v473, %v623
    %v632 = vmul.f32 %v628, 0.5
    %v633 = vmul.f32 %v629, 0.5
    %v634 = vmul.f32 %v630, 0.5
    %v635 = vtanh.pop %v632
    %v636 = vtanh.pop %v633
    %v637 = vtanh.pop %v634
    %v638 = vmul.f32 %v635, 0.5
    %v639 = vmul.f32 %v636, 0.5
    %v640 = vmul.f32 %v637, 0.5
    %v641 = vadd.f32 %v638, 0.5
    %v642 = vadd.f32 %v639, 0.5
    %v643 = vadd.f32 %v640, 0.5
    %v644 = vtanh.pop %v631
    %v646 = vrot.slane %v466, 6
    %v648 = vmul.f32 %v642, %v646
    %v649 = vmul.f32 %v641, %v644
    %v650 = vadd.f32 %v648, %v649
    %v651 = vtanh.pop %v650
    %v652 = vmul.f32 %v643, %v651
    %653 = vst [vmem:[#allocation3] sm:$0xc] %v652
    %v654 = vld [vmem:[#allocation2] sm:$0x30]
    %v655 = vld [vmem:[#allocation2 + $0x8] sm:$0x30]
    %v656 = vld [vmem:[#allocation2 + $0x10] sm:$0x30]
    %v657 = vld [vmem:[#allocation2 + $0x18] sm:$0x30]
    %v659 = vrot.slane %v652, 2
    %661 = vmatprep.subr.mxu0 %v238
    %662 = vmatpush1.msra.mxu0 %v237
    %663 = vmatprep.subr.mxu0 %v242
    %664 = vmatpush1.msra.mxu0 %v241
    %665 = vmatprep.subr.mxu0 %v246
    %666 = vmatpush1.msra.mxu0 %v245
    %667 = vmatprep.subr.mxu0 %v250
    %668 = vmatpush1.msra.mxu0 %v249
    %669 = vmatprep.subr.mxu0 %v254
    %670 = vmatpush1.msra.mxu0 %v253
    %671 = vmatprep.subr.mxu0 %v258
    %672 = vmatpush1.msra.mxu0 %v257
    %673 = vmatprep.subr.mxu0 %v262
    %674 = vmatpush1.msra.mxu0 %v261
    %675 = vmatprep.subr.mxu0 %v266
    %676 = vmatpush1.msra.mxu0 %v265
    %677 = vmatprep.subr.mxu0 %v270
    %678 = vmatpush1.msra.mxu0 %v269
    %679 = vmatprep.subr.mxu0 %v274
    %680 = vmatpush1.msra.mxu0 %v273
    %681 = vmatprep.subr.mxu0 %v278
    %682 = vmatpush1.msra.mxu0 %v277
    %683 = vmatprep.subr.mxu0 %v282
    %684 = vmatpush1.msra.mxu0 %v281
    %685 = vmatprep.subr.mxu0 %v286
    %686 = vmatpush1.msra.mxu0 %v285
    %687 = vmatprep.subr.mxu0 %v290
    %688 = vmatpush1.msra.mxu0 %v289
    %689 = vmatprep.subr.mxu0 %v294
    %690 = vmatpush1.msra.mxu0 %v293
    %691 = vmatprep.subr.mxu0 %v298
    %692 = vmatpush1.msra.mxu0 %v297
    %693 = vmatprep.subr.mxu0 0.0
    %694 = vmatpush1.msra.mxu0 0.0
    %695 = vmatprep.subr.mxu0 0.0
    %696 = vmatpush1.msra.mxu0 0.0
    %697 = vmatprep.subr.mxu0 0.0
    %698 = vmatpush1.msra.mxu0 0.0
    %699 = vmatprep.subr.mxu0 0.0
    %700 = vmatpush1.msra.mxu0 0.0
    %701 = vmatprep.subr.mxu0 0.0
    %702 = vmatpush1.msra.mxu0 0.0
    %703 = vmatprep.subr.mxu0 0.0
    %704 = vmatpush1.msra.mxu0 0.0
    %705 = vmatprep.subr.mxu0 0.0
    %706 = vmatpush1.msra.mxu0 0.0
    %707 = vmatprep.subr.mxu0 0.0
    %708 = vmatpush1.msra.mxu0 0.0
    %709 = vmatprep.subr.mxu0 0.0
    %710 = vmatpush1.msra.mxu0 0.0
    %711 = vmatprep.subr.mxu0 0.0
    %712 = vmatpush1.msra.mxu0 0.0
    %713 = vmatprep.subr.mxu0 0.0
    %714 = vmatpush1.msra.mxu0 0.0
    %715 = vmatprep.subr.mxu0 0.0
    %716 = vmatpush1.msra.mxu0 0.0
    %717 = vmatprep.subr.mxu0 0.0
    %718 = vmatpush1.msra.mxu0 0.0
    %719 = vmatprep.subr.mxu0 0.0
    %720 = vmatpush1.msra.mxu0 0.0
    %721 = vmatprep.subr.mxu0 0.0
    %722 = vmatpush1.msra.mxu0 0.0
    %723 = vmatprep.subr.mxu0 0.0
    %724 = vmatpush1.msra.mxu0 0.0
    %725 = vmatprep.mubr.f32.mxu0 0.0
    %726 = vmatmul.mubr.f32.gmra.mrb[0].mxu0 %v659
    %v727 = vpop.f32.mrb[0].mxu0
    %v728 = vadd.f32 0.0, %v727
    %v729 = vpop.f32.mrb[0].mxu0
    %v730 = vadd.f32 0.0, %v729
    %731 = vdwg.mxu0
    %732 = vmatprep.subr.mxu0 %v240
    %733 = vmatpush1.msra.mxu0 %v239
    %734 = vmatprep.subr.mxu0 %v244
    %735 = vmatpush1.msra.mxu0 %v243
    %736 = vmatprep.subr.mxu0 %v248
    %737 = vmatpush1.msra.mxu0 %v247
    %738 = vmatprep.subr.mxu0 %v252
    %739 = vmatpush1.msra.mxu0 %v251
    %740 = vmatprep.subr.mxu0 %v256
    %741 = vmatpush1.msra.mxu0 %v255
    %742 = vmatprep.subr.mxu0 %v260
    %743 = vmatpush1.msra.mxu0 %v259
    %744 = vmatprep.subr.mxu0 %v264
    %745 = vmatpush1.msra.mxu0 %v263
    %746 = vmatprep.subr.mxu0 %v268
    %747 = vmatpush1.msra.mxu0 %v267
    %748 = vmatprep.subr.mxu0 %v272
    %749 = vmatpush1.msra.mxu0 %v271
    %750 = vmatprep.subr.mxu0 %v276
    %751 = vmatpush1.msra.mxu0 %v275
    %752 = vmatprep.subr.mxu0 %v280
    %753 = vmatpush1.msra.mxu0 %v279
    %754 = vmatprep.subr.mxu0 %v284
    %755 = vmatpush1.msra.mxu0 %v283
    %756 = vmatprep.subr.mxu0 %v288
    %757 = vmatpush1.msra.mxu0 %v287
    %758 = vmatprep.subr.mxu0 %v292
    %759 = vmatpush1.msra.mxu0 %v291
    %760 = vmatprep.subr.mxu0 %v296
    %761 = vmatpush1.msra.mxu0 %v295
    %762 = vmatprep.subr.mxu0 %v300
    %763 = vmatpush1.msra.mxu0 %v299
    %764 = vmatprep.subr.mxu0 0.0
    %765 = vmatpush1.msra.mxu0 0.0
    %766 = vmatprep.subr.mxu0 0.0
    %767 = vmatpush1.msra.mxu0 0.0
    %768 = vmatprep.subr.mxu0 0.0
    %769 = vmatpush1.msra.mxu0 0.0
    %770 = vmatprep.subr.mxu0 0.0
    %771 = vmatpush1.msra.mxu0 0.0
    %772 = vmatprep.subr.mxu0 0.0
    %773 = vmatpush1.msra.mxu0 0.0
    %774 = vmatprep.subr.mxu0 0.0
    %775 = vmatpush1.msra.mxu0 0.0
    %776 = vmatprep.subr.mxu0 0.0
    %777 = vmatpush1.msra.mxu0 0.0
    %778 = vmatprep.subr.mxu0 0.0
    %779 = vmatpush1.msra.mxu0 0.0
    %780 = vmatprep.subr.mxu0 0.0
    %781 = vmatpush1.msra.mxu0 0.0
    %782 = vmatprep.subr.mxu0 0.0
    %783 = vmatpush1.msra.mxu0 0.0
    %784 = vmatprep.subr.mxu0 0.0
    %785 = vmatpush1.msra.mxu0 0.0
    %786 = vmatprep.subr.mxu0 0.0
    %787 = vmatpush1.msra.mxu0 0.0
    %788 = vmatprep.subr.mxu0 0.0
    %789 = vmatpush1.msra.mxu0 0.0
    %790 = vmatprep.subr.mxu0 0.0
    %791 = vmatpush1.msra.mxu0 0.0
    %792 = vmatprep.subr.mxu0 0.0
    %793 = vmatpush1.msra.mxu0 0.0
    %794 = vmatprep.subr.mxu0 0.0
    %795 = vmatpush1.msra.mxu0 0.0
    %796 = vmatprep.mubr.f32.mxu0 0.0
    %797 = vmatmul.mubr.f32.gmra.mrb[0].mxu0 %v659
    %v798 = vpop.f32.mrb[0].mxu0
    %v799 = vadd.f32 0.0, %v798
    %v800 = vpop.f32.mrb[0].mxu0
    %v801 = vadd.f32 0.0, %v800
    %802 = vdwg.mxu0
    %v807 = vrot.slane %v728, 4
    %v808 = vrot.slane %v730, 4
    %v809 = vrot.slane %v799, 4
    %v810 = vrot.slane %v801, 4
    %v815 = vadd.f32 %v654, %v807
    %v816 = vadd.f32 %v655, %v808
    %v817 = vadd.f32 %v656, %v809
    %v818 = vadd.f32 %v657, %v810
    %v819 = vmul.f32 %v815, 0.5
    %v820 = vmul.f32 %v816, 0.5
    %v821 = vmul.f32 %v817, 0.5
    %v822 = vtanh.pop %v819
    %v823 = vtanh.pop %v820
    %v824 = vtanh.pop %v821
    %v825 = vmul.f32 %v822, 0.5
    %v826 = vmul.f32 %v823, 0.5
    %v827 = vmul.f32 %v824, 0.5
    %v828 = vadd.f32 %v825, 0.5
    %v829 = vadd.f32 %v826, 0.5
    %v830 = vadd.f32 %v827, 0.5
    %v831 = vtanh.pop %v818
    %v833 = vrot.slane %v650, 6
    %v835 = vmul.f32 %v829, %v833
    %v836 = vmul.f32 %v828, %v831
    %v837 = vadd.f32 %v835, %v836
    %v838 = vtanh.pop %v837
    %v839 = vmul.f32 %v830, %v838
    %840 = vst [vmem:[#allocation3] sm:$0x30] %v839
    %v841 = vld [vmem:[#allocation2] sm:$0xc0]
    %v842 = vld [vmem:[#allocation2 + $0x8] sm:$0xc0]
    %v843 = vld [vmem:[#allocation2 + $0x10] sm:$0xc0]
    %v844 = vld [vmem:[#allocation2 + $0x18] sm:$0xc0]
    %v846 = vrot.slane %v839, 4
    %848 = vmatprep.subr.mxu0 %v238
    %849 = vmatpush1.msra.mxu0 %v237
    %850 = vmatprep.subr.mxu0 %v242
    %851 = vmatpush1.msra.mxu0 %v241
    %852 = vmatprep.subr.mxu0 %v246
    %853 = vmatpush1.msra.mxu0 %v245
    %854 = vmatprep.subr.mxu0 %v250
    %855 = vmatpush1.msra.mxu0 %v249
    %856 = vmatprep.subr.mxu0 %v254
    %857 = vmatpush1.msra.mxu0 %v253
    %858 = vmatprep.subr.mxu0 %v258
    %859 = vmatpush1.msra.mxu0 %v257
    %860 = vmatprep.subr.mxu0 %v262
    %861 = vmatpush1.msra.mxu0 %v261
    %862 = vmatprep.subr.mxu0 %v266
    %863 = vmatpush1.msra.mxu0 %v265
    %864 = vmatprep.subr.mxu0 %v270
    %865 = vmatpush1.msra.mxu0 %v269
    %866 = vmatprep.subr.mxu0 %v274
    %867 = vmatpush1.msra.mxu0 %v273
    %868 = vmatprep.subr.mxu0 %v278
    %869 = vmatpush1.msra.mxu0 %v277
    %870 = vmatprep.subr.mxu0 %v282
    %871 = vmatpush1.msra.mxu0 %v281
    %872 = vmatprep.subr.mxu0 %v286
    %873 = vmatpush1.msra.mxu0 %v285
    %874 = vmatprep.subr.mxu0 %v290
    %875 = vmatpush1.msra.mxu0 %v289
    %876 = vmatprep.subr.mxu0 %v294
    %877 = vmatpush1.msra.mxu0 %v293
    %878 = vmatprep.subr.mxu0 %v298
    %879 = vmatpush1.msra.mxu0 %v297
    %880 = vmatprep.subr.mxu0 0.0
    %881 = vmatpush1.msra.mxu0 0.0
    %882 = vmatprep.subr.mxu0 0.0
    %883 = vmatpush1.msra.mxu0 0.0
    %884 = vmatprep.subr.mxu0 0.0
    %885 = vmatpush1.msra.mxu0 0.0
    %886 = vmatprep.subr.mxu0 0.0
    %887 = vmatpush1.msra.mxu0 0.0
    %888 = vmatprep.subr.mxu0 0.0
    %889 = vmatpush1.msra.mxu0 0.0
    %890 = vmatprep.subr.mxu0 0.0
    %891 = vmatpush1.msra.mxu0 0.0
    %892 = vmatprep.subr.mxu0 0.0
    %893 = vmatpush1.msra.mxu0 0.0
    %894 = vmatprep.subr.mxu0 0.0
    %895 = vmatpush1.msra.mxu0 0.0
    %896 = vmatprep.subr.mxu0 0.0
    %897 = vmatpush1.msra.mxu0 0.0
    %898 = vmatprep.subr.mxu0 0.0
    %899 = vmatpush1.msra.mxu0 0.0
    %900 = vmatprep.subr.mxu0 0.0
    %901 = vmatpush1.msra.mxu0 0.0
    %902 = vmatprep.subr.mxu0 0.0
    %903 = vmatpush1.msra.mxu0 0.0
    %904 = vmatprep.subr.mxu0 0.0
    %905 = vmatpush1.msra.mxu0 0.0
    %906 = vmatprep.subr.mxu0 0.0
    %907 = vmatpush1.msra.mxu0 0.0
    %908 = vmatprep.subr.mxu0 0.0
    %909 = vmatpush1.msra.mxu0 0.0
    %910 = vmatprep.subr.mxu0 0.0
    %911 = vmatpush1.msra.mxu0 0.0
    %912 = vmatprep.mubr.f32.mxu0 0.0
    %913 = vmatmul.mubr.f32.gmra.mrb[0].mxu0 %v846
    %v914 = vpop.f32.mrb[0].mxu0
    %v915 = vadd.f32 0.0, %v914
    %v916 = vpop.f32.mrb[0].mxu0
    %v917 = vadd.f32 0.0, %v916
    %918 = vdwg.mxu0
    %919 = vmatprep.subr.mxu0 %v240
    %920 = vmatpush1.msra.mxu0 %v239
    %921 = vmatprep.subr.mxu0 %v244
    %922 = vmatpush1.msra.mxu0 %v243
    %923 = vmatprep.subr.mxu0 %v248
    %924 = vmatpush1.msra.mxu0 %v247
    %925 = vmatprep.subr.mxu0 %v252
    %926 = vmatpush1.msra.mxu0 %v251
    %927 = vmatprep.subr.mxu0 %v256
    %928 = vmatpush1.msra.mxu0 %v255
    %929 = vmatprep.subr.mxu0 %v260
    %930 = vmatpush1.msra.mxu0 %v259
    %931 = vmatprep.subr.mxu0 %v264
    %932 = vmatpush1.msra.mxu0 %v263
    %933 = vmatprep.subr.mxu0 %v268
    %934 = vmatpush1.msra.mxu0 %v267
    %935 = vmatprep.subr.mxu0 %v272
    %936 = vmatpush1.msra.mxu0 %v271
    %937 = vmatprep.subr.mxu0 %v276
    %938 = vmatpush1.msra.mxu0 %v275
    %939 = vmatprep.subr.mxu0 %v280
    %940 = vmatpush1.msra.mxu0 %v279
    %941 = vmatprep.subr.mxu0 %v284
    %942 = vmatpush1.msra.mxu0 %v283
    %943 = vmatprep.subr.mxu0 %v288
    %944 = vmatpush1.msra.mxu0 %v287
    %945 = vmatprep.subr.mxu0 %v292
    %946 = vmatpush1.msra.mxu0 %v291
    %947 = vmatprep.subr.mxu0 %v296
    %948 = vmatpush1.msra.mxu0 %v295
    %949 = vmatprep.subr.mxu0 %v300
    %950 = vmatpush1.msra.mxu0 %v299
    %951 = vmatprep.subr.mxu0 0.0
    %952 = vmatpush1.msra.mxu0 0.0
    %953 = vmatprep.subr.mxu0 0.0
    %954 = vmatpush1.msra.mxu0 0.0
    %955 = vmatprep.subr.mxu0 0.0
    %956 = vmatpush1.msra.mxu0 0.0
    %957 = vmatprep.subr.mxu0 0.0
    %958 = vmatpush1.msra.mxu0 0.0
    %959 = vmatprep.subr.mxu0 0.0
    %960 = vmatpush1.msra.mxu0 0.0
    %961 = vmatprep.subr.mxu0 0.0
    %962 = vmatpush1.msra.mxu0 0.0
    %963 = vmatprep.subr.mxu0 0.0
    %964 = vmatpush1.msra.mxu0 0.0
    %965 = vmatprep.subr.mxu0 0.0
    %966 = vmatpush1.msra.mxu0 0.0
    %967 = vmatprep.subr.mxu0 0.0
    %968 = vmatpush1.msra.mxu0 0.0
    %969 = vmatprep.subr.mxu0 0.0
    %970 = vmatpush1.msra.mxu0 0.0
    %971 = vmatprep.subr.mxu0 0.0
    %972 = vmatpush1.msra.mxu0 0.0
    %973 = vmatprep.subr.mxu0 0.0
    %974 = vmatpush1.msra.mxu0 0.0
    %975 = vmatprep.subr.mxu0 0.0
    %976 = vmatpush1.msra.mxu0 0.0
    %977 = vmatprep.subr.mxu0 0.0
    %978 = vmatpush1.msra.mxu0 0.0
    %979 = vmatprep.subr.mxu0 0.0
    %980 = vmatpush1.msra.mxu0 0.0
    %981 = vmatprep.subr.mxu0 0.0
    %982 = vmatpush1.msra.mxu0 0.0
    %983 = vmatprep.mubr.f32.mxu0 0.0
    %984 = vmatmul.mubr.f32.gmra.mrb[0].mxu0 %v846
    %v985 = vpop.f32.mrb[0].mxu0
    %v986 = vadd.f32 0.0, %v985
    %v987 = vpop.f32.mrb[0].mxu0
    %v988 = vadd.f32 0.0, %v987
    %989 = vdwg.mxu0
    %v994 = vrot.slane %v915, 2
    %v995 = vrot.slane %v917, 2
    %v996 = vrot.slane %v986, 2
    %v997 = vrot.slane %v988, 2
    %v1002 = vadd.f32 %v841, %v994
    %v1003 = vadd.f32 %v842, %v995
    %v1004 = vadd.f32 %v843, %v996
    %v1005 = vadd.f32 %v844, %v997
    %v1006 = vmul.f32 %v1002, 0.5
    %v1007 = vmul.f32 %v1003, 0.5
    %v1008 = vmul.f32 %v1004, 0.5
    %v1009 = vtanh.pop %v1006
    %v1010 = vtanh.pop %v1007
    %v1011 = vtanh.pop %v1008
    %v1012 = vmul.f32 %v1009, 0.5
    %v1013 = vmul.f32 %v1010, 0.5
    %v1014 = vmul.f32 %v1011, 0.5
    %v1015 = vadd.f32 %v1012, 0.5
    %v1016 = vadd.f32 %v1013, 0.5
    %v1017 = vadd.f32 %v1014, 0.5
    %v1018 = vtanh.pop %v1005
    %v1020 = vrot.slane %v837, 6
    %v1022 = vmul.f32 %v1016, %v1020
    %v1023 = vmul.f32 %v1015, %v1018
    %v1024 = vadd.f32 %v1022, %v1023
    %v1025 = vtanh.pop %v1024
    %v1026 = vmul.f32 %v1017, %v1025
    %1027 = vst [vmem:[#allocation3] sm:$0xc0] %v1026
    %v1028 = vld [vmem:[#allocation2 + $0x20] sm:$0x3]
    %v1029 = vld [vmem:[#allocation2 + $0x28] sm:$0x3]
    %v1030 = vld [vmem:[#allocation2 + $0x30] sm:$0x3]
    %v1031 = vld [vmem:[#allocation2 + $0x38] sm:$0x3]
    %v1033 = vrot.slane %v1026, 6
    %1035 = vmatprep.subr.mxu0 %v238
    %1036 = vmatpush1.msra.mxu0 %v237
    %1037 = vmatprep.subr.mxu0 %v242
    %1038 = vmatpush1.msra.mxu0 %v241
    %1039 = vmatprep.subr.mxu0 %v246
    %1040 = vmatpush1.msra.mxu0 %v245
    %1041 = vmatprep.subr.mxu0 %v250
    %1042 = vmatpush1.msra.mxu0 %v249
    %1043 = vmatprep.subr.mxu0 %v254
    %1044 = vmatpush1.msra.mxu0 %v253
    %1045 = vmatprep.subr.mxu0 %v258
    %1046 = vmatpush1.msra.mxu0 %v257
    %1047 = vmatprep.subr.mxu0 %v262
    %1048 = vmatpush1.msra.mxu0 %v261
    %1049 = vmatprep.subr.mxu0 %v266
    %1050 = vmatpush1.msra.mxu0 %v265
    %1051 = vmatprep.subr.mxu0 %v270
    %1052 = vmatpush1.msra.mxu0 %v269
    %1053 = vmatprep.subr.mxu0 %v274
    %1054 = vmatpush1.msra.mxu0 %v273
    %1055 = vmatprep.subr.mxu0 %v278
    %1056 = vmatpush1.msra.mxu0 %v277
    %1057 = vmatprep.subr.mxu0 %v282
    %1058 = vmatpush1.msra.mxu0 %v281
    %1059 = vmatprep.subr.mxu0 %v286
    %1060 = vmatpush1.msra.mxu0 %v285
    %1061 = vmatprep.subr.mxu0 %v290
    %1062 = vmatpush1.msra.mxu0 %v289
    %1063 = vmatprep.subr.mxu0 %v294
    %1064 = vmatpush1.msra.mxu0 %v293
    %1065 = vmatprep.subr.mxu0 %v298
    %1066 = vmatpush1.msra.mxu0 %v297
    %1067 = vmatprep.subr.mxu0 0.0
    %1068 = vmatpush1.msra.mxu0 0.0
    %1069 = vmatprep.subr.mxu0 0.0
    %1070 = vmatpush1.msra.mxu0 0.0
    %1071 = vmatprep.subr.mxu0 0.0
    %1072 = vmatpush1.msra.mxu0 0.0
    %1073 = vmatprep.subr.mxu0 0.0
    %1074 = vmatpush1.msra.mxu0 0.0
    %1075 = vmatprep.subr.mxu0 0.0
    %1076 = vmatpush1.msra.mxu0 0.0
    %1077 = vmatprep.subr.mxu0 0.0
    %1078 = vmatpush1.msra.mxu0 0.0
    %1079 = vmatprep.subr.mxu0 0.0
    %1080 = vmatpush1.msra.mxu0 0.0
    %1081 = vmatprep.subr.mxu0 0.0
    %1082 = vmatpush1.msra.mxu0 0.0
    %1083 = vmatprep.subr.mxu0 0.0
    %1084 = vmatpush1.msra.mxu0 0.0
    %1085 = vmatprep.subr.mxu0 0.0
    %1086 = vmatpush1.msra.mxu0 0.0
    %1087 = vmatprep.subr.mxu0 0.0
    %1088 = vmatpush1.msra.mxu0 0.0
    %1089 = vmatprep.subr.mxu0 0.0
    %1090 = vmatpush1.msra.mxu0 0.0
    %1091 = vmatprep.subr.mxu0 0.0
    %1092 = vmatpush1.msra.mxu0 0.0
    %1093 = vmatprep.subr.mxu0 0.0
    %1094 = vmatpush1.msra.mxu0 0.0
    %1095 = vmatprep.subr.mxu0 0.0
    %1096 = vmatpush1.msra.mxu0 0.0
    %1097 = vmatprep.subr.mxu0 0.0
    %1098 = vmatpush1.msra.mxu0 0.0
    %1099 = vmatprep.mubr.f32.mxu0 0.0
    %1100 = vmatmul.mubr.f32.gmra.mrb[0].mxu0 %v1033
    %v1101 = vpop.f32.mrb[0].mxu0
    %v1102 = vadd.f32 0.0, %v1101
    %v1103 = vpop.f32.mrb[0].mxu0
    %v1104 = vadd.f32 0.0, %v1103
    %1105 = vdwg.mxu0
    %1106 = vmatprep.subr.mxu0 %v240
    %1107 = vmatpush1.msra.mxu0 %v239
    %1108 = vmatprep.subr.mxu0 %v244
    %1109 = vmatpush1.msra.mxu0 %v243
    %1110 = vmatprep.subr.mxu0 %v248
    %1111 = vmatpush1.msra.mxu0 %v247
    %1112 = vmatprep.subr.mxu0 %v252
    %1113 = vmatpush1.msra.mxu0 %v251
    %1114 = vmatprep.subr.mxu0 %v256
    %1115 = vmatpush1.msra.mxu0 %v255
    %1116 = vmatprep.subr.mxu0 %v260
    %1117 = vmatpush1.msra.mxu0 %v259
    %1118 = vmatprep.subr.mxu0 %v264
    %1119 = vmatpush1.msra.mxu0 %v263
    %1120 = vmatprep.subr.mxu0 %v268
    %1121 = vmatpush1.msra.mxu0 %v267
    %1122 = vmatprep.subr.mxu0 %v272
    %1123 = vmatpush1.msra.mxu0 %v271
    %1124 = vmatprep.subr.mxu0 %v276
    %1125 = vmatpush1.msra.mxu0 %v275
    %1126 = vmatprep.subr.mxu0 %v280
    %1127 = vmatpush1.msra.mxu0 %v279
    %1128 = vmatprep.subr.mxu0 %v284
    %1129 = vmatpush1.msra.mxu0 %v283
    %1130 = vmatprep.subr.mxu0 %v288
    %1131 = vmatpush1.msra.mxu0 %v287
    %1132 = vmatprep.subr.mxu0 %v292
    %1133 = vmatpush1.msra.mxu0 %v291
    %1134 = vmatprep.subr.mxu0 %v296
    %1135 = vmatpush1.msra.mxu0 %v295
    %1136 = vmatprep.subr.mxu0 %v300
    %1137 = vmatpush1.msra.mxu0 %v299
    %1138 = vmatprep.subr.mxu0 0.0
    %1139 = vmatpush1.msra.mxu0 0.0
    %1140 = vmatprep.subr.mxu0 0.0
    %1141 = vmatpush1.msra.mxu0 0.0
    %1142 = vmatprep.subr.mxu0 0.0
    %1143 = vmatpush1.msra.mxu0 0.0
    %1144 = vmatprep.subr.mxu0 0.0
    %1145 = vmatpush1.msra.mxu0 0.0
    %1146 = vmatprep.subr.mxu0 0.0
    %1147 = vmatpush1.msra.mxu0 0.0
    %1148 = vmatprep.subr.mxu0 0.0
    %1149 = vmatpush1.msra.mxu0 0.0
    %1150 = vmatprep.subr.mxu0 0.0
    %1151 = vmatpush1.msra.mxu0 0.0
    %1152 = vmatprep.subr.mxu0 0.0
    %1153 = vmatpush1.msra.mxu0 0.0
    %1154 = vmatprep.subr.mxu0 0.0
    %1155 = vmatpush1.msra.mxu0 0.0
    %1156 = vmatprep.subr.mxu0 0.0
    %1157 = vmatpush1.msra.mxu0 0.0
    %1158 = vmatprep.subr.mxu0 0.0
    %1159 = vmatpush1.msra.mxu0 0.0
    %1160 = vmatprep.subr.mxu0 0.0
    %1161 = vmatpush1.msra.mxu0 0.0
    %1162 = vmatprep.subr.mxu0 0.0
    %1163 = vmatpush1.msra.mxu0 0.0
    %1164 = vmatprep.subr.mxu0 0.0
    %1165 = vmatpush1.msra.mxu0 0.0
    %1166 = vmatprep.subr.mxu0 0.0
    %1167 = vmatpush1.msra.mxu0 0.0
    %1168 = vmatprep.subr.mxu0 0.0
    %1169 = vmatpush1.msra.mxu0 0.0
    %1170 = vmatprep.mubr.f32.mxu0 0.0
    %1171 = vmatmul.mubr.f32.gmra.mrb[0].mxu0 %v1033
    %v1172 = vpop.f32.mrb[0].mxu0
    %v1173 = vadd.f32 0.0, %v1172
    %v1174 = vpop.f32.mrb[0].mxu0
    %v1175 = vadd.f32 0.0, %v1174
    %1176 = vdwg.mxu0
    %v1177 = vadd.f32 %v1028, %v1102
    %v1178 = vadd.f32 %v1029, %v1104
    %v1179 = vadd.f32 %v1030, %v1173
    %v1180 = vadd.f32 %v1031, %v1175
    %v1181 = vmul.f32 %v1177, 0.5
    %v1182 = vmul.f32 %v1178, 0.5
    %v1183 = vmul.f32 %v1179, 0.5
    %v1184 = vtanh.pop %v1181
    %v1185 = vtanh.pop %v1182
    %v1186 = vtanh.pop %v1183
    %v1187 = vmul.f32 %v1184, 0.5
    %v1188 = vmul.f32 %v1185, 0.5
    %v1189 = vmul.f32 %v1186, 0.5
    %v1190 = vadd.f32 %v1187, 0.5
    %v1191 = vadd.f32 %v1188, 0.5
    %v1192 = vadd.f32 %v1189, 0.5
    %v1193 = vtanh.pop %v1180
    %v1195 = vrot.slane %v1024, 6
    %v1197 = vmul.f32 %v1191, %v1195
    %v1198 = vmul.f32 %v1190, %v1193
    %v1199 = vadd.f32 %v1197, %v1198
    %v1200 = vtanh.pop %v1199
    %v1201 = vmul.f32 %v1192, %v1200
    %1202 = vst [vmem:[#allocation3 + $0x8] sm:$0x3] %v1201
    %v1203 = vld [vmem:[#allocation2 + $0x20] sm:$0xc]
    %v1204 = vld [vmem:[#allocation2 + $0x28] sm:$0xc]
    %v1205 = vld [vmem:[#allocation2 + $0x30] sm:$0xc]
    %v1206 = vld [vmem:[#allocation2 + $0x38] sm:$0xc]
    %1207 = vmatprep.subr.mxu0 %v238
    %1208 = vmatpush1.msra.mxu0 %v237
    %1209 = vmatprep.subr.mxu0 %v242
    %1210 = vmatpush1.msra.mxu0 %v241
    %1211 = vmatprep.subr.mxu0 %v246
    %1212 = vmatpush1.msra.mxu0 %v245
    %1213 = vmatprep.subr.mxu0 %v250
    %1214 = vmatpush1.msra.mxu0 %v249
    %1215 = vmatprep.subr.mxu0 %v254
    %1216 = vmatpush1.msra.mxu0 %v253
    %1217 = vmatprep.subr.mxu0 %v258
    %1218 = vmatpush1.msra.mxu0 %v257
    %1219 = vmatprep.subr.mxu0 %v262
    %1220 = vmatpush1.msra.mxu0 %v261
    %1221 = vmatprep.subr.mxu0 %v266
    %1222 = vmatpush1.msra.mxu0 %v265
    %1223 = vmatprep.subr.mxu0 %v270
    %1224 = vmatpush1.msra.mxu0 %v269
    %1225 = vmatprep.subr.mxu0 %v274
    %1226 = vmatpush1.msra.mxu0 %v273
    %1227 = vmatprep.subr.mxu0 %v278
    %1228 = vmatpush1.msra.mxu0 %v277
    %1229 = vmatprep.subr.mxu0 %v282
    %1230 = vmatpush1.msra.mxu0 %v281
    %1231 = vmatprep.subr.mxu0 %v286
    %1232 = vmatpush1.msra.mxu0 %v285
    %1233 = vmatprep.subr.mxu0 %v290
    %1234 = vmatpush1.msra.mxu0 %v289
    %1235 = vmatprep.subr.mxu0 %v294
    %1236 = vmatpush1.msra.mxu0 %v293
    %1237 = vmatprep.subr.mxu0 %v298
    %1238 = vmatpush1.msra.mxu0 %v297
    %1239 = vmatprep.subr.mxu0 0.0
    %1240 = vmatpush1.msra.mxu0 0.0
    %1241 = vmatprep.subr.mxu0 0.0
    %1242 = vmatpush1.msra.mxu0 0.0
    %1243 = vmatprep.subr.mxu0 0.0
    %1244 = vmatpush1.msra.mxu0 0.0
    %1245 = vmatprep.subr.mxu0 0.0
    %1246 = vmatpush1.msra.mxu0 0.0
    %1247 = vmatprep.subr.mxu0 0.0
    %1248 = vmatpush1.msra.mxu0 0.0
    %1249 = vmatprep.subr.mxu0 0.0
    %1250 = vmatpush1.msra.mxu0 0.0
    %1251 = vmatprep.subr.mxu0 0.0
    %1252 = vmatpush1.msra.mxu0 0.0
    %1253 = vmatprep.subr.mxu0 0.0
    %1254 = vmatpush1.msra.mxu0 0.0
    %1255 = vmatprep.subr.mxu0 0.0
    %1256 = vmatpush1.msra.mxu0 0.0
    %1257 = vmatprep.subr.mxu0 0.0
    %1258 = vmatpush1.msra.mxu0 0.0
    %1259 = vmatprep.subr.mxu0 0.0
    %1260 = vmatpush1.msra.mxu0 0.0
    %1261 = vmatprep.subr.mxu0 0.0
    %1262 = vmatpush1.msra.mxu0 0.0
    %1263 = vmatprep.subr.mxu0 0.0
    %1264 = vmatpush1.msra.mxu0 0.0
    %1265 = vmatprep.subr.mxu0 0.0
    %1266 = vmatpush1.msra.mxu0 0.0
    %1267 = vmatprep.subr.mxu0 0.0
    %1268 = vmatpush1.msra.mxu0 0.0
    %1269 = vmatprep.subr.mxu0 0.0
    %1270 = vmatpush1.msra.mxu0 0.0
    %1271 = vmatprep.mubr.f32.mxu0 0.0
    %1272 = vmatmul.mubr.f32.gmra.mrb[0].mxu0 %v1201
    %v1273 = vpop.f32.mrb[0].mxu0
    %v1274 = vadd.f32 0.0, %v1273
    %v1275 = vpop.f32.mrb[0].mxu0
    %v1276 = vadd.f32 0.0, %v1275
    %1277 = vdwg.mxu0
    %1278 = vmatprep.subr.mxu0 %v240
    %1279 = vmatpush1.msra.mxu0 %v239
    %1280 = vmatprep.subr.mxu0 %v244
    %1281 = vmatpush1.msra.mxu0 %v243
    %1282 = vmatprep.subr.mxu0 %v248
    %1283 = vmatpush1.msra.mxu0 %v247
    %1284 = vmatprep.subr.mxu0 %v252
    %1285 = vmatpush1.msra.mxu0 %v251
    %1286 = vmatprep.subr.mxu0 %v256
    %1287 = vmatpush1.msra.mxu0 %v255
    %1288 = vmatprep.subr.mxu0 %v260
    %1289 = vmatpush1.msra.mxu0 %v259
    %1290 = vmatprep.subr.mxu0 %v264
    %1291 = vmatpush1.msra.mxu0 %v263
    %1292 = vmatprep.subr.mxu0 %v268
    %1293 = vmatpush1.msra.mxu0 %v267
    %1294 = vmatprep.subr.mxu0 %v272
    %1295 = vmatpush1.msra.mxu0 %v271
    %1296 = vmatprep.subr.mxu0 %v276
    %1297 = vmatpush1.msra.mxu0 %v275
    %1298 = vmatprep.subr.mxu0 %v280
    %1299 = vmatpush1.msra.mxu0 %v279
    %1300 = vmatprep.subr.mxu0 %v284
    %1301 = vmatpush1.msra.mxu0 %v283
    %1302 = vmatprep.subr.mxu0 %v288
    %1303 = vmatpush1.msra.mxu0 %v287
    %1304 = vmatprep.subr.mxu0 %v292
    %1305 = vmatpush1.msra.mxu0 %v291
    %1306 = vmatprep.subr.mxu0 %v296
    %1307 = vmatpush1.msra.mxu0 %v295
    %1308 = vmatprep.subr.mxu0 %v300
    %1309 = vmatpush1.msra.mxu0 %v299
    %1310 = vmatprep.subr.mxu0 0.0
    %1311 = vmatpush1.msra.mxu0 0.0
    %1312 = vmatprep.subr.mxu0 0.0
    %1313 = vmatpush1.msra.mxu0 0.0
    %1314 = vmatprep.subr.mxu0 0.0
    %1315 = vmatpush1.msra.mxu0 0.0
    %1316 = vmatprep.subr.mxu0 0.0
    %1317 = vmatpush1.msra.mxu0 0.0
    %1318 = vmatprep.subr.mxu0 0.0
    %1319 = vmatpush1.msra.mxu0 0.0
    %1320 = vmatprep.subr.mxu0 0.0
    %1321 = vmatpush1.msra.mxu0 0.0
    %1322 = vmatprep.subr.mxu0 0.0
    %1323 = vmatpush1.msra.mxu0 0.0
    %1324 = vmatprep.subr.mxu0 0.0
    %1325 = vmatpush1.msra.mxu0 0.0
    %1326 = vmatprep.subr.mxu0 0.0
    %1327 = vmatpush1.msra.mxu0 0.0
    %1328 = vmatprep.subr.mxu0 0.0
    %1329 = vmatpush1.msra.mxu0 0.0
    %1330 = vmatprep.subr.mxu0 0.0
    %1331 = vmatpush1.msra.mxu0 0.0
    %1332 = vmatprep.subr.mxu0 0.0
    %1333 = vmatpush1.msra.mxu0 0.0
    %1334 = vmatprep.subr.mxu0 0.0
    %1335 = vmatpush1.msra.mxu0 0.0
    %1336 = vmatprep.subr.mxu0 0.0
    %1337 = vmatpush1.msra.mxu0 0.0
    %1338 = vmatprep.subr.mxu0 0.0
    %1339 = vmatpush1.msra.mxu0 0.0
    %1340 = vmatprep.subr.mxu0 0.0
    %1341 = vmatpush1.msra.mxu0 0.0
    %1342 = vmatprep.mubr.f32.mxu0 0.0
    %1343 = vmatmul.mubr.f32.gmra.mrb[0].mxu0 %v1201
    %v1344 = vpop.f32.mrb[0].mxu0
    %v1345 = vadd.f32 0.0, %v1344
    %v1346 = vpop.f32.mrb[0].mxu0
    %v1347 = vadd.f32 0.0, %v1346
    %1348 = vdwg.mxu0
    %v1353 = vrot.slane %v1274, 6
    %v1354 = vrot.slane %v1276, 6
    %v1355 = vrot.slane %v1345, 6
    %v1356 = vrot.slane %v1347, 6
    %v1361 = vadd.f32 %v1203, %v1353
    %v1362 = vadd.f32 %v1204, %v1354
    %v1363 = vadd.f32 %v1205, %v1355
    %v1364 = vadd.f32 %v1206, %v1356
    %v1365 = vmul.f32 %v1361, 0.5
    %v1366 = vmul.f32 %v1362, 0.5
    %v1367 = vmul.f32 %v1363, 0.5
    %v1368 = vtanh.pop %v1365
    %v1369 = vtanh.pop %v1366
    %v1370 = vtanh.pop %v1367
    %v1371 = vmul.f32 %v1368, 0.5
    %v1372 = vmul.f32 %v1369, 0.5
    %v1373 = vmul.f32 %v1370, 0.5
    %v1374 = vadd.f32 %v1371, 0.5
    %v1375 = vadd.f32 %v1372, 0.5
    %v1376 = vadd.f32 %v1373, 0.5
    %v1377 = vtanh.pop %v1364
    %v1379 = vrot.slane %v1199, 6
    %v1381 = vmul.f32 %v1375, %v1379
    %v1382 = vmul.f32 %v1374, %v1377
    %v1383 = vadd.f32 %v1381, %v1382
    %v1384 = vtanh.pop %v1383
    %v1385 = vmul.f32 %v1376, %v1384
    %1386 = vst [vmem:[#allocation3 + $0x8] sm:$0xc] %v1385
    %v1387 = vld [vmem:[#allocation2 + $0x20] sm:$0x30]
    %v1388 = vld [vmem:[#allocation2 + $0x28] sm:$0x30]
    %v1389 = vld [vmem:[#allocation2 + $0x30] sm:$0x30]
    %v1390 = vld [vmem:[#allocation2 + $0x38] sm:$0x30]
    %v1392 = vrot.slane %v1385, 2
    %1394 = vmatprep.subr.mxu0 %v238
    %1395 = vmatpush1.msra.mxu0 %v237
    %1396 = vmatprep.subr.mxu0 %v242
    %1397 = vmatpush1.msra.mxu0 %v241
    %1398 = vmatprep.subr.mxu0 %v246
    %1399 = vmatpush1.msra.mxu0 %v245
    %1400 = vmatprep.subr.mxu0 %v250
    %1401 = vmatpush1.msra.mxu0 %v249
    %1402 = vmatprep.subr.mxu0 %v254
    %1403 = vmatpush1.msra.mxu0 %v253
    %1404 = vmatprep.subr.mxu0 %v258
    %1405 = vmatpush1.msra.mxu0 %v257
    %1406 = vmatprep.subr.mxu0 %v262
    %1407 = vmatpush1.msra.mxu0 %v261
    %1408 = vmatprep.subr.mxu0 %v266
    %1409 = vmatpush1.msra.mxu0 %v265
    %1410 = vmatprep.subr.mxu0 %v270
    %1411 = vmatpush1.msra.mxu0 %v269
    %1412 = vmatprep.subr.mxu0 %v274
    %1413 = vmatpush1.msra.mxu0 %v273
    %1414 = vmatprep.subr.mxu0 %v278
    %1415 = vmatpush1.msra.mxu0 %v277
    %1416 = vmatprep.subr.mxu0 %v282
    %1417 = vmatpush1.msra.mxu0 %v281
    %1418 = vmatprep.subr.mxu0 %v286
    %1419 = vmatpush1.msra.mxu0 %v285
    %1420 = vmatprep.subr.mxu0 %v290
    %1421 = vmatpush1.msra.mxu0 %v289
    %1422 = vmatprep.subr.mxu0 %v294
    %1423 = vmatpush1.msra.mxu0 %v293
    %1424 = vmatprep.subr.mxu0 %v298
    %1425 = vmatpush1.msra.mxu0 %v297
    %1426 = vmatprep.subr.mxu0 0.0
    %1427 = vmatpush1.msra.mxu0 0.0
    %1428 = vmatprep.subr.mxu0 0.0
    %1429 = vmatpush1.msra.mxu0 0.0
    %1430 = vmatprep.subr.mxu0 0.0
    %1431 = vmatpush1.msra.mxu0 0.0
    %1432 = vmatprep.subr.mxu0 0.0
    %1433 = vmatpush1.msra.mxu0 0.0
    %1434 = vmatprep.subr.mxu0 0.0
    %1435 = vmatpush1.msra.mxu0 0.0
    %1436 = vmatprep.subr.mxu0 0.0
    %1437 = vmatpush1.msra.mxu0 0.0
    %1438 = vmatprep.subr.mxu0 0.0
    %1439 = vmatpush1.msra.mxu0 0.0
    %1440 = vmatprep.subr.mxu0 0.0
    %1441 = vmatpush1.msra.mxu0 0.0
    %1442 = vmatprep.subr.mxu0 0.0
    %1443 = vmatpush1.msra.mxu0 0.0
    %1444 = vmatprep.subr.mxu0 0.0
    %1445 = vmatpush1.msra.mxu0 0.0
    %1446 = vmatprep.subr.mxu0 0.0
    %1447 = vmatpush1.msra.mxu0 0.0
    %1448 = vmatprep.subr.mxu0 0.0
    %1449 = vmatpush1.msra.mxu0 0.0
    %1450 = vmatprep.subr.mxu0 0.0
    %1451 = vmatpush1.msra.mxu0 0.0
    %1452 = vmatprep.subr.mxu0 0.0
    %1453 = vmatpush1.msra.mxu0 0.0
    %1454 = vmatprep.subr.mxu0 0.0
    %1455 = vmatpush1.msra.mxu0 0.0
    %1456 = vmatprep.subr.mxu0 0.0
    %1457 = vmatpush1.msra.mxu0 0.0
    %1458 = vmatprep.mubr.f32.mxu0 0.0
    %1459 = vmatmul.mubr.f32.gmra.mrb[0].mxu0 %v1392
    %v1460 = vpop.f32.mrb[0].mxu0
    %v1461 = vadd.f32 0.0, %v1460
    %v1462 = vpop.f32.mrb[0].mxu0
    %v1463 = vadd.f32 0.0, %v1462
    %1464 = vdwg.mxu0
    %1465 = vmatprep.subr.mxu0 %v240
    %1466 = vmatpush1.msra.mxu0 %v239
    %1467 = vmatprep.subr.mxu0 %v244
    %1468 = vmatpush1.msra.mxu0 %v243
    %1469 = vmatprep.subr.mxu0 %v248
    %1470 = vmatpush1.msra.mxu0 %v247
    %1471 = vmatprep.subr.mxu0 %v252
    %1472 = vmatpush1.msra.mxu0 %v251
    %1473 = vmatprep.subr.mxu0 %v256
    %1474 = vmatpush1.msra.mxu0 %v255
    %1475 = vmatprep.subr.mxu0 %v260
    %1476 = vmatpush1.msra.mxu0 %v259
    %1477 = vmatprep.subr.mxu0 %v264
    %1478 = vmatpush1.msra.mxu0 %v263
    %1479 = vmatprep.subr.mxu0 %v268
    %1480 = vmatpush1.msra.mxu0 %v267
    %1481 = vmatprep.subr.mxu0 %v272
    %1482 = vmatpush1.msra.mxu0 %v271
    %1483 = vmatprep.subr.mxu0 %v276
    %1484 = vmatpush1.msra.mxu0 %v275
    %1485 = vmatprep.subr.mxu0 %v280
    %1486 = vmatpush1.msra.mxu0 %v279
    %1487 = vmatprep.subr.mxu0 %v284
    %1488 = vmatpush1.msra.mxu0 %v283
    %1489 = vmatprep.subr.mxu0 %v288
    %1490 = vmatpush1.msra.mxu0 %v287
    %1491 = vmatprep.subr.mxu0 %v292
    %1492 = vmatpush1.msra.mxu0 %v291
    %1493 = vmatprep.subr.mxu0 %v296
    %1494 = vmatpush1.msra.mxu0 %v295
    %1495 = vmatprep.subr.mxu0 %v300
    %1496 = vmatpush1.msra.mxu0 %v299
    %1497 = vmatprep.subr.mxu0 0.0
    %1498 = vmatpush1.msra.mxu0 0.0
    %1499 = vmatprep.subr.mxu0 0.0
    %1500 = vmatpush1.msra.mxu0 0.0
    %1501 = vmatprep.subr.mxu0 0.0
    %1502 = vmatpush1.msra.mxu0 0.0
    %1503 = vmatprep.subr.mxu0 0.0
    %1504 = vmatpush1.msra.mxu0 0.0
    %1505 = vmatprep.subr.mxu0 0.0
    %1506 = vmatpush1.msra.mxu0 0.0
    %1507 = vmatprep.subr.mxu0 0.0
    %1508 = vmatpush1.msra.mxu0 0.0
    %1509 = vmatprep.subr.mxu0 0.0
    %1510 = vmatpush1.msra.mxu0 0.0
    %1511 = vmatprep.subr.mxu0 0.0
    %1512 = vmatpush1.msra.mxu0 0.0
    %1513 = vmatprep.subr.mxu0 0.0
    %1514 = vmatpush1.msra.mxu0 0.0
    %1515 = vmatprep.subr.mxu0 0.0
    %1516 = vmatpush1.msra.mxu0 0.0
    %1517 = vmatprep.subr.mxu0 0.0
    %1518 = vmatpush1.msra.mxu0 0.0
    %1519 = vmatprep.subr.mxu0 0.0
    %1520 = vmatpush1.msra.mxu0 0.0
    %1521 = vmatprep.subr.mxu0 0.0
    %1522 = vmatpush1.msra.mxu0 0.0
    %1523 = vmatprep.subr.mxu0 0.0
    %1524 = vmatpush1.msra.mxu0 0.0
    %1525 = vmatprep.subr.mxu0 0.0
    %1526 = vmatpush1.msra.mxu0 0.0
    %1527 = vmatprep.subr.mxu0 0.0
    %1528 = vmatpush1.msra.mxu0 0.0
    %1529 = vmatprep.mubr.f32.mxu0 0.0
    %1530 = vmatmul.mubr.f32.gmra.mrb[0].mxu0 %v1392
    %v1531 = vpop.f32.mrb[0].mxu0
    %v1532 = vadd.f32 0.0, %v1531
    %v1533 = vpop.f32.mrb[0].mxu0
    %v1534 = vadd.f32 0.0, %v1533
    %1535 = vdwg.mxu0
    %v1540 = vrot.slane %v1461, 4
    %v1541 = vrot.slane %v1463, 4
    %v1542 = vrot.slane %v1532, 4
    %v1543 = vrot.slane %v1534, 4
    %v1548 = vadd.f32 %v1387, %v1540
    %v1549 = vadd.f32 %v1388, %v1541
    %v1550 = vadd.f32 %v1389, %v1542
    %v1551 = vadd.f32 %v1390, %v1543
    %v1552 = vmul.f32 %v1548, 0.5
    %v1553 = vmul.f32 %v1549, 0.5
    %v1554 = vmul.f32 %v1550, 0.5
    %v1555 = vtanh.pop %v1552
    %v1556 = vtanh.pop %v1553
    %v1557 = vtanh.pop %v1554
    %v1558 = vmul.f32 %v1555, 0.5
    %v1559 = vmul.f32 %v1556, 0.5
    %v1560 = vmul.f32 %v1557, 0.5
    %v1561 = vadd.f32 %v1558, 0.5
    %v1562 = vadd.f32 %v1559, 0.5
    %v1563 = vadd.f32 %v1560, 0.5
    %v1564 = vtanh.pop %v1551
    %v1566 = vrot.slane %v1383, 6
    %v1568 = vmul.f32 %v1562, %v1566
    %v1569 = vmul.f32 %v1561, %v1564
    %v1570 = vadd.f32 %v1568, %v1569
    %v1571 = vtanh.pop %v1570
    %v1572 = vmul.f32 %v1563, %v1571
    %1573 = vst [vmem:[#allocation3 + $0x8] sm:$0x30] %v1572
    %v1574 = vld [vmem:[#allocation2 + $0x20] sm:$0xc0]
    %v1575 = vld [vmem:[#allocation2 + $0x28] sm:$0xc0]
    %v1576 = vld [vmem:[#allocation2 + $0x30] sm:$0xc0]
    %v1577 = vld [vmem:[#allocation2 + $0x38] sm:$0xc0]
    %v1579 = vrot.slane %v1572, 4
    %1581 = vmatprep.subr.mxu0 %v238
    %1582 = vmatpush1.msra.mxu0 %v237
    %1583 = vmatprep.subr.mxu0 %v242
    %1584 = vmatpush1.msra.mxu0 %v241
    %1585 = vmatprep.subr.mxu0 %v246
    %1586 = vmatpush1.msra.mxu0 %v245
    %1587 = vmatprep.subr.mxu0 %v250
    %1588 = vmatpush1.msra.mxu0 %v249
    %1589 = vmatprep.subr.mxu0 %v254
    %1590 = vmatpush1.msra.mxu0 %v253
    %1591 = vmatprep.subr.mxu0 %v258
    %1592 = vmatpush1.msra.mxu0 %v257
    %1593 = vmatprep.subr.mxu0 %v262
    %1594 = vmatpush1.msra.mxu0 %v261
    %1595 = vmatprep.subr.mxu0 %v266
    %1596 = vmatpush1.msra.mxu0 %v265
    %1597 = vmatprep.subr.mxu0 %v270
    %1598 = vmatpush1.msra.mxu0 %v269
    %1599 = vmatprep.subr.mxu0 %v274
    %1600 = vmatpush1.msra.mxu0 %v273
    %1601 = vmatprep.subr.mxu0 %v278
    %1602 = vmatpush1.msra.mxu0 %v277
    %1603 = vmatprep.subr.mxu0 %v282
    %1604 = vmatpush1.msra.mxu0 %v281
    %1605 = vmatprep.subr.mxu0 %v286
    %1606 = vmatpush1.msra.mxu0 %v285
    %1607 = vmatprep.subr.mxu0 %v290
    %1608 = vmatpush1.msra.mxu0 %v289
    %1609 = vmatprep.subr.mxu0 %v294
    %1610 = vmatpush1.msra.mxu0 %v293
    %1611 = vmatprep.subr.mxu0 %v298
    %1612 = vmatpush1.msra.mxu0 %v297
    %1613 = vmatprep.subr.mxu0 0.0
    %1614 = vmatpush1.msra.mxu0 0.0
    %1615 = vmatprep.subr.mxu0 0.0
    %1616 = vmatpush1.msra.mxu0 0.0
    %1617 = vmatprep.subr.mxu0 0.0
    %1618 = vmatpush1.msra.mxu0 0.0
    %1619 = vmatprep.subr.mxu0 0.0
    %1620 = vmatpush1.msra.mxu0 0.0
    %1621 = vmatprep.subr.mxu0 0.0
    %1622 = vmatpush1.msra.mxu0 0.0
    %1623 = vmatprep.subr.mxu0 0.0
    %1624 = vmatpush1.msra.mxu0 0.0
    %1625 = vmatprep.subr.mxu0 0.0
    %1626 = vmatpush1.msra.mxu0 0.0
    %1627 = vmatprep.subr.mxu0 0.0
    %1628 = vmatpush1.msra.mxu0 0.0
    %1629 = vmatprep.subr.mxu0 0.0
    %1630 = vmatpush1.msra.mxu0 0.0
    %1631 = vmatprep.subr.mxu0 0.0
    %1632 = vmatpush1.msra.mxu0 0.0
    %1633 = vmatprep.subr.mxu0 0.0
    %1634 = vmatpush1.msra.mxu0 0.0
    %1635 = vmatprep.subr.mxu0 0.0
    %1636 = vmatpush1.msra.mxu0 0.0
    %1637 = vmatprep.subr.mxu0 0.0
    %1638 = vmatpush1.msra.mxu0 0.0
    %1639 = vmatprep.subr.mxu0 0.0
    %1640 = vmatpush1.msra.mxu0 0.0
    %1641 = vmatprep.subr.mxu0 0.0
    %1642 = vmatpush1.msra.mxu0 0.0
    %1643 = vmatprep.subr.mxu0 0.0
    %1644 = vmatpush1.msra.mxu0 0.0
    %1645 = vmatprep.mubr.f32.mxu0 0.0
    %1646 = vmatmul.mubr.f32.gmra.mrb[0].mxu0 %v1579
    %v1647 = vpop.f32.mrb[0].mxu0
    %v1648 = vadd.f32 0.0, %v1647
    %v1649 = vpop.f32.mrb[0].mxu0
    %v1650 = vadd.f32 0.0, %v1649
    %1651 = vdwg.mxu0
    %1652 = vmatprep.subr.mxu0 %v240
    %1653 = vmatpush1.msra.mxu0 %v239
    %1654 = vmatprep.subr.mxu0 %v244
    %1655 = vmatpush1.msra.mxu0 %v243
    %1656 = vmatprep.subr.mxu0 %v248
    %1657 = vmatpush1.msra.mxu0 %v247
    %1658 = vmatprep.subr.mxu0 %v252
    %1659 = vmatpush1.msra.mxu0 %v251
    %1660 = vmatprep.subr.mxu0 %v256
    %1661 = vmatpush1.msra.mxu0 %v255
    %1662 = vmatprep.subr.mxu0 %v260
    %1663 = vmatpush1.msra.mxu0 %v259
    %1664 = vmatprep.subr.mxu0 %v264
    %1665 = vmatpush1.msra.mxu0 %v263
    %1666 = vmatprep.subr.mxu0 %v268
    %1667 = vmatpush1.msra.mxu0 %v267
    %1668 = vmatprep.subr.mxu0 %v272
    %1669 = vmatpush1.msra.mxu0 %v271
    %1670 = vmatprep.subr.mxu0 %v276
    %1671 = vmatpush1.msra.mxu0 %v275
    %1672 = vmatprep.subr.mxu0 %v280
    %1673 = vmatpush1.msra.mxu0 %v279
    %1674 = vmatprep.subr.mxu0 %v284
    %1675 = vmatpush1.msra.mxu0 %v283
    %1676 = vmatprep.subr.mxu0 %v288
    %1677 = vmatpush1.msra.mxu0 %v287
    %1678 = vmatprep.subr.mxu0 %v292
    %1679 = vmatpush1.msra.mxu0 %v291
    %1680 = vmatprep.subr.mxu0 %v296
    %1681 = vmatpush1.msra.mxu0 %v295
    %1682 = vmatprep.subr.mxu0 %v300
    %1683 = vmatpush1.msra.mxu0 %v299
    %1684 = vmatprep.subr.mxu0 0.0
    %1685 = vmatpush1.msra.mxu0 0.0
    %1686 = vmatprep.subr.mxu0 0.0
    %1687 = vmatpush1.msra.mxu0 0.0
    %1688 = vmatprep.subr.mxu0 0.0
    %1689 = vmatpush1.msra.mxu0 0.0
    %1690 = vmatprep.subr.mxu0 0.0
    %1691 = vmatpush1.msra.mxu0 0.0
    %1692 = vmatprep.subr.mxu0 0.0
    %1693 = vmatpush1.msra.mxu0 0.0
    %1694 = vmatprep.subr.mxu0 0.0
    %1695 = vmatpush1.msra.mxu0 0.0
    %1696 = vmatprep.subr.mxu0 0.0
    %1697 = vmatpush1.msra.mxu0 0.0
    %1698 = vmatprep.subr.mxu0 0.0
    %1699 = vmatpush1.msra.mxu0 0.0
    %1700 = vmatprep.subr.mxu0 0.0
    %1701 = vmatpush1.msra.mxu0 0.0
    %1702 = vmatprep.subr.mxu0 0.0
    %1703 = vmatpush1.msra.mxu0 0.0
    %1704 = vmatprep.subr.mxu0 0.0
    %1705 = vmatpush1.msra.mxu0 0.0
    %1706 = vmatprep.subr.mxu0 0.0
    %1707 = vmatpush1.msra.mxu0 0.0
    %1708 = vmatprep.subr.mxu0 0.0
    %1709 = vmatpush1.msra.mxu0 0.0
    %1710 = vmatprep.subr.mxu0 0.0
    %1711 = vmatpush1.msra.mxu0 0.0
    %1712 = vmatprep.subr.mxu0 0.0
    %1713 = vmatpush1.msra.mxu0 0.0
    %1714 = vmatprep.subr.mxu0 0.0
    %1715 = vmatpush1.msra.mxu0 0.0
    %1716 = vmatprep.mubr.f32.mxu0 0.0
    %1717 = vmatmul.mubr.f32.gmra.mrb[0].mxu0 %v1579
    %v1718 = vpop.f32.mrb[0].mxu0
    %v1719 = vadd.f32 0.0, %v1718
    %v1720 = vpop.f32.mrb[0].mxu0
    %v1721 = vadd.f32 0.0, %v1720
    %1722 = vdwg.mxu0
    %v1727 = vrot.slane %v1648, 2
    %v1728 = vrot.slane %v1650, 2
    %v1729 = vrot.slane %v1719, 2
    %v1730 = vrot.slane %v1721, 2
    %v1735 = vadd.f32 %v1574, %v1727
    %v1736 = vadd.f32 %v1575, %v1728
    %v1737 = vadd.f32 %v1576, %v1729
    %v1738 = vadd.f32 %v1577, %v1730
    %v1739 = vmul.f32 %v1735, 0.5
    %v1740 = vmul.f32 %v1736, 0.5
    %v1741 = vmul.f32 %v1737, 0.5
    %v1742 = vtanh.pop %v1739
    %v1743 = vtanh.pop %v1740
    %v1744 = vtanh.pop %v1741
    %v1745 = vmul.f32 %v1742, 0.5
    %v1746 = vmul.f32 %v1743, 0.5
    %v1747 = vmul.f32 %v1744, 0.5
    %v1748 = vadd.f32 %v1745, 0.5
    %v1749 = vadd.f32 %v1746, 0.5
    %v1750 = vadd.f32 %v1747, 0.5
    %v1751 = vtanh.pop %v1738
    %v1753 = vrot.slane %v1570, 6
    %v1755 = vmul.f32 %v1749, %v1753
    %v1756 = vmul.f32 %v1748, %v1751
    %v1757 = vadd.f32 %v1755, %v1756
    %v1758 = vtanh.pop %v1757
    %v1759 = vmul.f32 %v1750, %v1758
    %1760 = vst [vmem:[#allocation3 + $0x8] sm:$0xc0] %v1759
    %v1761 = vld [vmem:[#allocation3] sm:$0xff]
    %v1762 = vld [vmem:[#allocation3 + $0x8] sm:$0xff]
    %v1763 = vld [vmem:[#allocation8] sm:$0xff]
    %v1764 = vld [vmem:[#allocation8 + $0x8] sm:$0xff]
    %v1765 = vld [vmem:[#allocation8 + $0x10] sm:$0xff]
    %v1766 = vld [vmem:[#allocation8 + $0x18] sm:$0xff]
    %v1767 = vld [vmem:[#allocation8 + $0x20] sm:$0xff]
    %v1768 = vld [vmem:[#allocation8 + $0x28] sm:$0xff]
    %v1769 = vld [vmem:[#allocation8 + $0x30] sm:$0xff]
    %v1770 = vld [vmem:[#allocation8 + $0x38] sm:$0xff]
    %v1771 = vld [vmem:[#allocation8 + $0x40] sm:$0xff]
    %v1772 = vld [vmem:[#allocation8 + $0x48] sm:$0xff]
    %v1773 = vld [vmem:[#allocation8 + $0x50] sm:$0xff]
    %v1774 = vld [vmem:[#allocation8 + $0x58] sm:$0xff]
    %v1775 = vld [vmem:[#allocation8 + $0x60] sm:$0xff]
    %v1776 = vld [vmem:[#allocation8 + $0x68] sm:$0xff]
    %v1777 = vld [vmem:[#allocation8 + $0x70] sm:$0xff]
    %v1778 = vld [vmem:[#allocation8 + $0x78] sm:$0xff]
    %v1779 = vld [vmem:[#allocation8 + $0x80] sm:$0x1]
    %v1780 = vld [vmem:[#allocation8 + $0x88] sm:$0xff]
    %v1781 = vld [vmem:[#allocation8 + $0x90] sm:$0xff]
    %v1782 = vld [vmem:[#allocation8 + $0x98] sm:$0xff]
    %v1783 = vld [vmem:[#allocation8 + $0xa0] sm:$0xff]
    %v1784 = vld [vmem:[#allocation8 + $0xa8] sm:$0xff]
    %v1785 = vld [vmem:[#allocation8 + $0xb0] sm:$0xff]
    %v1786 = vld [vmem:[#allocation8 + $0xb8] sm:$0xff]
    %v1787 = vld [vmem:[#allocation8 + $0xc0] sm:$0xff]
    %v1788 = vld [vmem:[#allocation8 + $0xc8] sm:$0xff]
    %v1789 = vld [vmem:[#allocation8 + $0xd0] sm:$0xff]
    %v1790 = vld [vmem:[#allocation8 + $0xd8] sm:$0xff]
    %v1791 = vld [vmem:[#allocation8 + $0xe0] sm:$0xff]
    %v1792 = vld [vmem:[#allocation8 + $0xe8] sm:$0xff]
    %v1793 = vld [vmem:[#allocation8 + $0xf0] sm:$0xff]
    %v1794 = vld [vmem:[#allocation8 + $0xf8] sm:$0xff]
    %v1795 = vld [vmem:[#allocation8 + $0x100] sm:$0xff]
    %v1796 = vld [vmem:[#allocation8 + $0x108] sm:$0x1]
    %v1797 = vld [vmem:[#allocation8 + $0x110] sm:$0xff]
    %v1798 = vld [vmem:[#allocation8 + $0x118] sm:$0xff]
    %v1799 = vld [vmem:[#allocation8 + $0x120] sm:$0xff]
    %v1800 = vld [vmem:[#allocation8 + $0x128] sm:$0xff]
    %v1801 = vld [vmem:[#allocation8 + $0x130] sm:$0xff]
    %v1802 = vld [vmem:[#allocation8 + $0x138] sm:$0xff]
    %v1803 = vld [vmem:[#allocation8 + $0x140] sm:$0xff]
    %v1804 = vld [vmem:[#allocation8 + $0x148] sm:$0xff]
    %v1805 = vld [vmem:[#allocation8 + $0x150] sm:$0xff]
    %v1806 = vld [vmem:[#allocation8 + $0x158] sm:$0xff]
    %v1807 = vld [vmem:[#allocation8 + $0x160] sm:$0xff]
    %v1808 = vld [vmem:[#allocation8 + $0x168] sm:$0xff]
    %v1809 = vld [vmem:[#allocation8 + $0x170] sm:$0xff]
    %v1810 = vld [vmem:[#allocation8 + $0x178] sm:$0xff]
    %v1811 = vld [vmem:[#allocation8 + $0x180] sm:$0xff]
    %v1812 = vld [vmem:[#allocation8 + $0x188] sm:$0xff]
    %v1813 = vld [vmem:[#allocation8 + $0x190] sm:$0x1]
    %v1814 = vlaneseq
    %v1815 = vshrl.u32 %v1814, 7
    %v1816 = vsub.s32 0, %v1815
    %v1817 = vrot.slane %v1779, %v1816
    %1818 = vmatprep.subr.mxu0 0.0
    %1819 = vmatpush1.msra.mxu0 %v1763
    %1820 = vmatprep.subr.mxu0 0.0
    %1821 = vmatpush1.msra.mxu0 %v1764
    %1822 = vmatprep.subr.mxu0 0.0
    %1823 = vmatpush1.msra.mxu0 %v1765
    %1824 = vmatprep.subr.mxu0 0.0
    %1825 = vmatpush1.msra.mxu0 %v1766
    %1826 = vmatprep.subr.mxu0 0.0
    %1827 = vmatpush1.msra.mxu0 %v1767
    %1828 = vmatprep.subr.mxu0 0.0
    %1829 = vmatpush1.msra.mxu0 %v1768
    %1830 = vmatprep.subr.mxu0 0.0
    %1831 = vmatpush1.msra.mxu0 %v1769
    %1832 = vmatprep.subr.mxu0 0.0
    %1833 = vmatpush1.msra.mxu0 %v1770
    %1834 = vmatprep.subr.mxu0 0.0
    %1835 = vmatpush1.msra.mxu0 %v1771
    %1836 = vmatprep.subr.mxu0 0.0
    %1837 = vmatpush1.msra.mxu0 %v1772
    %1838 = vmatprep.subr.mxu0 0.0
    %1839 = vmatpush1.msra.mxu0 %v1773
    %1840 = vmatprep.subr.mxu0 0.0
    %1841 = vmatpush1.msra.mxu0 %v1774
    %1842 = vmatprep.subr.mxu0 0.0
    %1843 = vmatpush1.msra.mxu0 %v1775
    %1844 = vmatprep.subr.mxu0 0.0
    %1845 = vmatpush1.msra.mxu0 %v1776
    %1846 = vmatprep.subr.mxu0 0.0
    %1847 = vmatpush1.msra.mxu0 %v1777
    %1848 = vmatprep.subr.mxu0 0.0
    %1849 = vmatpush1.msra.mxu0 %v1778
    %1850 = vmatprep.subr.mxu0 0.0
    %1851 = vmatpush1.msra.mxu0 0.0
    %1852 = vmatprep.subr.mxu0 0.0
    %1853 = vmatpush1.msra.mxu0 0.0
    %1854 = vmatprep.subr.mxu0 0.0
    %1855 = vmatpush1.msra.mxu0 0.0
    %1856 = vmatprep.subr.mxu0 0.0
    %1857 = vmatpush1.msra.mxu0 0.0
    %1858 = vmatprep.subr.mxu0 0.0
    %1859 = vmatpush1.msra.mxu0 0.0
    %1860 = vmatprep.subr.mxu0 0.0
    %1861 = vmatpush1.msra.mxu0 0.0
    %1862 = vmatprep.subr.mxu0 0.0
    %1863 = vmatpush1.msra.mxu0 0.0
    %1864 = vmatprep.subr.mxu0 0.0
    %1865 = vmatpush1.msra.mxu0 0.0
    %1866 = vmatprep.subr.mxu0 0.0
    %1867 = vmatpush1.msra.mxu0 0.0
    %1868 = vmatprep.subr.mxu0 0.0
    %1869 = vmatpush1.msra.mxu0 0.0
    %1870 = vmatprep.subr.mxu0 0.0
    %1871 = vmatpush1.msra.mxu0 0.0
    %1872 = vmatprep.subr.mxu0 0.0
    %1873 = vmatpush1.msra.mxu0 0.0
    %1874 = vmatprep.subr.mxu0 0.0
    %1875 = vmatpush1.msra.mxu0 0.0
    %1876 = vmatprep.subr.mxu0 0.0
    %1877 = vmatpush1.msra.mxu0 0.0
    %1878 = vmatprep.subr.mxu0 0.0
    %1879 = vmatpush1.msra.mxu0 0.0
    %1880 = vmatprep.subr.mxu0 0.0
    %1881 = vmatpush1.msra.mxu0 0.0
    %1882 = vmatprep.mubr.f32.mxu0 0.0
    %1883 = vmatmul.mubr.f32.gmra.mrb[0].mxu0 %v1761
    %v1884 = vpop.f32.mrb[0].mxu0
    %v1885 = vadd.f32 %v1817, %v1884
    %v1886 = vpop.f32.mrb[0].mxu0
    %1887 = vmatprep.mubr.f32.mxu0 0.0
    %1888 = vmatmul.mubr.f32.gmra.mrb[0].mxu0 %v1762
    %v1889 = vpop.f32.mrb[0].mxu0
    %v1890 = vadd.f32 %v1817, %v1889
    %v1891 = vpop.f32.mrb[0].mxu0
    %1892 = vdwg.mxu0
    %v1894 = vrot.slane %v1885, 2
    %v1896 = vmax.f32 %v1885, %v1894
    %v1897 = vrot.slane %v1885, 4
    %v1899 = vmax.f32 %v1896, %v1897
    %v1900 = vrot.slane %v1885, 6
    %v1902 = vmax.f32 %v1899, %v1900
    %v1903 = vmax.f32 %v1902, %v1890
    %v1905 = vrot.slane %v1890, 2
    %v1907 = vmax.f32 %v1903, %v1905
    %v1908 = vrot.slane %v1890, 4
    %v1910 = vmax.f32 %v1907, %v1908
    %v1911 = vrot.slane %v1890, 6
    %v1913 = vmax.f32 %v1910, %v1911
    %v1915 = vrot.slane %v1913, 6
    %v1917 = vrot.slane %v1913, 4
    %v1919 = vrot.slane %v1913, 2
    %vm1921 = vcmask 1041408
    %v1922 = vsel %vm1921, %v1913, %v1915
    %vm1923 = vcmask 1043456
    %v1924 = vsel %vm1923, %v1922, %v1917
    %vm1925 = vcmask 1045504
    %v1926 = vsel %vm1925, %v1924, %v1919
    %v1927 = vsub.f32 %v1885, %v1926
    %v1928 = vsub.f32 %v1890, %v1926
    %v1929 = vmul.f32 %v1927, 1.442695
    %v1930 = vpow.pop %v1929
    %v1931 = vmul.f32 %v1928, 1.442695
    %v1932 = vpow.pop %v1931
    %v1934 = vrot.slane %v1930, 2
    %v1936 = vadd.f32 %v1930, %v1934
    %v1937 = vrot.slane %v1930, 4
    %v1939 = vadd.f32 %v1936, %v1937
    %v1940 = vrot.slane %v1930, 6
    %v1942 = vadd.f32 %v1939, %v1940
    %v1943 = vadd.f32 %v1942, %v1932
    %v1945 = vrot.slane %v1932, 2
    %v1947 = vadd.f32 %v1943, %v1945
    %v1948 = vrot.slane %v1932, 4
    %v1950 = vadd.f32 %v1947, %v1948
    %v1951 = vrot.slane %v1932, 6
    %v1953 = vadd.f32 %v1950, %v1951
    %v1954 = vrcp.pop %v1953
    %v1955 = vmul.f32 %v1953, %v1954
    %v1956 = vsub.f32 2.0, %v1955
    %v1957 = vmul.f32 %v1954, %v1956
    %v1959 = vrot.slane %v1957, 6
    %v1961 = vrot.slane %v1957, 4
    %v1963 = vrot.slane %v1957, 2
    %v1965 = vsel %vm1921, %v1957, %v1959
    %v1966 = vsel %vm1923, %v1965, %v1961
    %v1967 = vsel %vm1925, %v1966, %v1963
    %v1968 = vmul.f32 %v1930, %v1967
    %v1969 = vmul.f32 %v1932, %v1967
    %v1970 = vlaneseq
    %v1971 = vshrl.u32 %v1970, 7
    %v1972 = vsub.s32 0, %v1971
    %v1973 = vrot.slane %v1796, %v1972
    %1974 = vmatprep.subr.mxu0 0.0
    %1975 = vmatpush1.msra.mxu0 %v1780
    %1976 = vmatprep.subr.mxu0 0.0
    %1977 = vmatpush1.msra.mxu0 %v1781
    %1978 = vmatprep.subr.mxu0 0.0
    %1979 = vmatpush1.msra.mxu0 %v1782
    %1980 = vmatprep.subr.mxu0 0.0
    %1981 = vmatpush1.msra.mxu0 %v1783
    %1982 = vmatprep.subr.mxu0 0.0
    %1983 = vmatpush1.msra.mxu0 %v1784
    %1984 = vmatprep.subr.mxu0 0.0
    %1985 = vmatpush1.msra.mxu0 %v1785
    %1986 = vmatprep.subr.mxu0 0.0
    %1987 = vmatpush1.msra.mxu0 %v1786
    %1988 = vmatprep.subr.mxu0 0.0
    %1989 = vmatpush1.msra.mxu0 %v1787
    %1990 = vmatprep.subr.mxu0 0.0
    %1991 = vmatpush1.msra.mxu0 %v1788
    %1992 = vmatprep.subr.mxu0 0.0
    %1993 = vmatpush1.msra.mxu0 %v1789
    %1994 = vmatprep.subr.mxu0 0.0
    %1995 = vmatpush1.msra.mxu0 %v1790
    %1996 = vmatprep.subr.mxu0 0.0
    %1997 = vmatpush1.msra.mxu0 %v1791
    %1998 = vmatprep.subr.mxu0 0.0
    %1999 = vmatpush1.msra.mxu0 %v1792
    %2000 = vmatprep.subr.mxu0 0.0
    %2001 = vmatpush1.msra.mxu0 %v1793
    %2002 = vmatprep.subr.mxu0 0.0
    %2003 = vmatpush1.msra.mxu0 %v1794
    %2004 = vmatprep.subr.mxu0 0.0
    %2005 = vmatpush1.msra.mxu0 %v1795
    %2006 = vmatprep.subr.mxu0 0.0
    %2007 = vmatpush1.msra.mxu0 0.0
    %2008 = vmatprep.subr.mxu0 0.0
    %2009 = vmatpush1.msra.mxu0 0.0
    %2010 = vmatprep.subr.mxu0 0.0
    %2011 = vmatpush1.msra.mxu0 0.0
    %2012 = vmatprep.subr.mxu0 0.0
    %2013 = vmatpush1.msra.mxu0 0.0
    %2014 = vmatprep.subr.mxu0 0.0
    %2015 = vmatpush1.msra.mxu0 0.0
    %2016 = vmatprep.subr.mxu0 0.0
    %2017 = vmatpush1.msra.mxu0 0.0
    %2018 = vmatprep.subr.mxu0 0.0
    %2019 = vmatpush1.msra.mxu0 0.0
    %2020 = vmatprep.subr.mxu0 0.0
    %2021 = vmatpush1.msra.mxu0 0.0
    %2022 = vmatprep.subr.mxu0 0.0
    %2023 = vmatpush1.msra.mxu0 0.0
    %2024 = vmatprep.subr.mxu0 0.0
    %2025 = vmatpush1.msra.mxu0 0.0
    %2026 = vmatprep.subr.mxu0 0.0
    %2027 = vmatpush1.msra.mxu0 0.0
    %2028 = vmatprep.subr.mxu0 0.0
    %2029 = vmatpush1.msra.mxu0 0.0
    %2030 = vmatprep.subr.mxu0 0.0
    %2031 = vmatpush1.msra.mxu0 0.0
    %2032 = vmatprep.subr.mxu0 0.0
    %2033 = vmatpush1.msra.mxu0 0.0
    %2034 = vmatprep.subr.mxu0 0.0
    %2035 = vmatpush1.msra.mxu0 0.0
    %2036 = vmatprep.subr.mxu0 0.0
    %2037 = vmatpush1.msra.mxu0 0.0
    %2038 = vmatprep.mubr.f32.mxu0 0.0
    %2039 = vmatmul.mubr.f32.gmra.mrb[0].mxu0 %v1968
    %v2040 = vpop.f32.mrb[0].mxu0
    %v2041 = vadd.f32 %v1973, %v2040
    %v2042 = vpop.f32.mrb[0].mxu0
    %2043 = vmatprep.mubr.f32.mxu0 0.0
    %2044 = vmatmul.mubr.f32.gmra.mrb[0].mxu0 %v1969
    %v2045 = vpop.f32.mrb[0].mxu0
    %v2046 = vadd.f32 %v1973, %v2045
    %v2047 = vpop.f32.mrb[0].mxu0
    %2048 = vdwg.mxu0
    %v2050 = vrot.slane %v2041, 2
    %v2052 = vmax.f32 %v2041, %v2050
    %v2053 = vrot.slane %v2041, 4
    %v2055 = vmax.f32 %v2052, %v2053
    %v2056 = vrot.slane %v2041, 6
    %v2058 = vmax.f32 %v2055, %v2056
    %v2059 = vmax.f32 %v2058, %v2046
    %v2061 = vrot.slane %v2046, 2
    %v2063 = vmax.f32 %v2059, %v2061
    %v2064 = vrot.slane %v2046, 4
    %v2066 = vmax.f32 %v2063, %v2064
    %v2067 = vrot.slane %v2046, 6
    %v2069 = vmax.f32 %v2066, %v2067
    %v2071 = vrot.slane %v2069, 6
    %v2073 = vrot.slane %v2069, 4
    %v2075 = vrot.slane %v2069, 2
    %v2077 = vsel %vm1921, %v2069, %v2071
    %v2078 = vsel %vm1923, %v2077, %v2073
    %v2079 = vsel %vm1925, %v2078, %v2075
    %v2080 = vsub.f32 %v2041, %v2079
    %v2081 = vsub.f32 %v2046, %v2079
    %v2082 = vmul.f32 %v2080, 1.442695
    %v2083 = vpow.pop %v2082
    %v2084 = vmul.f32 %v2081, 1.442695
    %v2085 = vpow.pop %v2084
    %v2087 = vrot.slane %v2083, 2
    %v2089 = vadd.f32 %v2083, %v2087
    %v2090 = vrot.slane %v2083, 4
    %v2092 = vadd.f32 %v2089, %v2090
    %v2093 = vrot.slane %v2083, 6
    %v2095 = vadd.f32 %v2092, %v2093
    %v2096 = vadd.f32 %v2095, %v2085
    %v2098 = vrot.slane %v2085, 2
    %v2100 = vadd.f32 %v2096, %v2098
    %v2101 = vrot.slane %v2085, 4
    %v2103 = vadd.f32 %v2100, %v2101
    %v2104 = vrot.slane %v2085, 6
    %v2106 = vadd.f32 %v2103, %v2104
    %v2107 = vrcp.pop %v2106
    %v2108 = vmul.f32 %v2106, %v2107
    %v2109 = vsub.f32 2.0, %v2108
    %v2110 = vmul.f32 %v2107, %v2109
    %v2112 = vrot.slane %v2110, 6
    %v2114 = vrot.slane %v2110, 4
    %v2116 = vrot.slane %v2110, 2
    %v2118 = vsel %vm1921, %v2110, %v2112
    %v2119 = vsel %vm1923, %v2118, %v2114
    %v2120 = vsel %vm1925, %v2119, %v2116
    %v2121 = vmul.f32 %v2083, %v2120
    %v2122 = vmul.f32 %v2085, %v2120
    %v2123 = vlaneseq
    %v2124 = vshrl.u32 %v2123, 7
    %v2125 = vsub.s32 0, %v2124
    %v2126 = vrot.slane %v1813, %v2125
    %2127 = vmatprep.subr.mxu0 0.0
    %2128 = vmatpush1.msra.mxu0 %v1797
    %2129 = vmatprep.subr.mxu0 0.0
    %2130 = vmatpush1.msra.mxu0 %v1798
    %2131 = vmatprep.subr.mxu0 0.0
    %2132 = vmatpush1.msra.mxu0 %v1799
    %2133 = vmatprep.subr.mxu0 0.0
    %2134 = vmatpush1.msra.mxu0 %v1800
    %2135 = vmatprep.subr.mxu0 0.0
    %2136 = vmatpush1.msra.mxu0 %v1801
    %2137 = vmatprep.subr.mxu0 0.0
    %2138 = vmatpush1.msra.mxu0 %v1802
    %2139 = vmatprep.subr.mxu0 0.0
    %2140 = vmatpush1.msra.mxu0 %v1803
    %2141 = vmatprep.subr.mxu0 0.0
    %2142 = vmatpush1.msra.mxu0 %v1804
    %2143 = vmatprep.subr.mxu0 0.0
    %2144 = vmatpush1.msra.mxu0 %v1805
    %2145 = vmatprep.subr.mxu0 0.0
    %2146 = vmatpush1.msra.mxu0 %v1806
    %2147 = vmatprep.subr.mxu0 0.0
    %2148 = vmatpush1.msra.mxu0 %v1807
    %2149 = vmatprep.subr.mxu0 0.0
    %2150 = vmatpush1.msra.mxu0 %v1808
    %2151 = vmatprep.subr.mxu0 0.0
    %2152 = vmatpush1.msra.mxu0 %v1809
    %2153 = vmatprep.subr.mxu0 0.0
    %2154 = vmatpush1.msra.mxu0 %v1810
    %2155 = vmatprep.subr.mxu0 0.0
    %2156 = vmatpush1.msra.mxu0 %v1811
    %2157 = vmatprep.subr.mxu0 0.0
    %2158 = vmatpush1.msra.mxu0 %v1812
    %2159 = vmatprep.subr.mxu0 0.0
    %2160 = vmatpush1.msra.mxu0 0.0
    %2161 = vmatprep.subr.mxu0 0.0
    %2162 = vmatpush1.msra.mxu0 0.0
    %2163 = vmatprep.subr.mxu0 0.0
    %2164 = vmatpush1.msra.mxu0 0.0
    %2165 = vmatprep.subr.mxu0 0.0
    %2166 = vmatpush1.msra.mxu0 0.0
    %2167 = vmatprep.subr.mxu0 0.0
    %2168 = vmatpush1.msra.mxu0 0.0
    %2169 = vmatprep.subr.mxu0 0.0
    %2170 = vmatpush1.msra.mxu0 0.0
    %2171 = vmatprep.subr.mxu0 0.0
    %2172 = vmatpush1.msra.mxu0 0.0
    %2173 = vmatprep.subr.mxu0 0.0
    %2174 = vmatpush1.msra.mxu0 0.0
    %2175 = vmatprep.subr.mxu0 0.0
    %2176 = vmatpush1.msra.mxu0 0.0
    %2177 = vmatprep.subr.mxu0 0.0
    %2178 = vmatpush1.msra.mxu0 0.0
    %2179 = vmatprep.subr.mxu0 0.0
    %2180 = vmatpush1.msra.mxu0 0.0
    %2181 = vmatprep.subr.mxu0 0.0
    %2182 = vmatpush1.msra.mxu0 0.0
    %2183 = vmatprep.subr.mxu0 0.0
    %2184 = vmatpush1.msra.mxu0 0.0
    %2185 = vmatprep.subr.mxu0 0.0
    %2186 = vmatpush1.msra.mxu0 0.0
    %2187 = vmatprep.subr.mxu0 0.0
    %2188 = vmatpush1.msra.mxu0 0.0
    %2189 = vmatprep.subr.mxu0 0.0
    %2190 = vmatpush1.msra.mxu0 0.0
    %2191 = vmatprep.mubr.f32.mxu0 0.0
    %2192 = vmatmul.mubr.f32.gmra.mrb[0].mxu0 %v2121
    %v2193 = vpop.f32.mrb[0].mxu0
    %v2194 = vadd.f32 %v2126, %v2193
    %v2195 = vpop.f32.mrb[0].mxu0
    %2196 = vmatprep.mubr.f32.mxu0 0.0
    %2197 = vmatmul.mubr.f32.gmra.mrb[0].mxu0 %v2122
    %v2198 = vpop.f32.mrb[0].mxu0
    %v2199 = vadd.f32 %v2126, %v2198
    %v2200 = vpop.f32.mrb[0].mxu0
    %2201 = vdwg.mxu0
    %v2202 = vmul.f32 %v2194, 0.5
    %v2203 = vmul.f32 %v2199, 0.5
    %v2204 = vtanh.pop %v2202
    %v2205 = vtanh.pop %v2203
    %v2206 = vmul.f32 %v2204, 0.5
    %v2207 = vmul.f32 %v2205, 0.5
    %v2208 = vadd.f32 %v2206, 0.5
    %v2209 = vadd.f32 %v2207, 0.5
    %vm2210 = vcmask 15360
    %2211 = vst.msk [vmem:[%s4] sm:$0xff] %vm2210, %v2208
    %2212 = vst.msk [vmem:[%s4 + $0x8] sm:$0xff] %vm2210, %v2209
    // Predicated region
    $region30: #{net_forward.1} parent=1 // pred_check
      _
    $region31: #{net_forward.1} parent=1 // pred_check_branch
      %2214 = sbr.rel (0) target = $region33
    $region32: #{net_forward.1} parent=1 // pred_region
      _
    $region33: #{net_forward.1} parent=1 // pred_fallthru
      _
    // Predicated region
    $region34: #{net_forward.1} parent=1 // pred_check
      _
    $region35: #{net_forward.1} parent=1 // pred_check_branch
      %2216 = sbr.rel (0) target = $region37
    $region36: #{net_forward.1} parent=1 // pred_region
      _
    $region37: #{net_forward.1} parent=1 // pred_fallthru
      _
    %2217 = vsyncpa [#allocation5], 1
    %2218 = vsyncpa [#allocation7], 1

</llo_original>
